<compile_context>
chip_gen: v7x
topology: tpu7x:2x2x1
jax: 0.10.0
libtpu: 0.0.40
codegen_flags: <defaults>
</compile_context>

<pallas_src>
import jax
import jax.numpy as jnp
from jax.experimental import pallas as pl
from jax.experimental.pallas import tpu as pltpu

D = 64 * 15   # 960
EPS = 1e-5    # nn.BatchNorm1d default


def _round_up(n, m):
    return (n + m - 1) // m * m


# ---------------------------------------------------------------------------
# Pass 1: per-row-block  h = x @ W1  (bf16 operands, f32 accumulate)
#         plus per-block first/second moments for the full-batch BN stats.
# Note: b1 is intentionally omitted — it is a mathematical no-op under
# training-mode BatchNorm (exactly cancelled by the mean subtraction).
# ---------------------------------------------------------------------------
def _linear1_stats_kernel(x_ref, w1_ref, h_ref, stats_ref):
    h = jnp.dot(x_ref[...].astype(jnp.bfloat16), w1_ref[...],
                preferred_element_type=jnp.float32)          # (bn, D) f32
    h_ref[...] = h
    stats_ref[0:1, :] = jnp.sum(h, axis=0, keepdims=True)     # sum
    stats_ref[1:2, :] = jnp.sum(h * h, axis=0, keepdims=True) # sum of squares


# ---------------------------------------------------------------------------
# Pass 2: fused BN affine (one FMA pass) + ReLU in f32, then a @ W2 + b2 on
#         the MXU with bf16 operands / f32 accumulation.
# ---------------------------------------------------------------------------
def _bn_relu_linear2_kernel(h_ref, scale_ref, shift_ref, w2_ref, b2_ref, o_ref):
    a = jnp.maximum(h_ref[...] * scale_ref[...] + shift_ref[...], 0.0)
    out = jnp.dot(a.astype(jnp.bfloat16), w2_ref[...],
                  preferred_element_type=jnp.float32)
    o_ref[...] = out + b2_ref[...]


def mlp_proj(x, w1, b1, gamma, beta, w2, b2, *, block_n=256):
    """x: (N, D) f32.  w1/w2: (D, D) in (in, out) layout (bf16 or f32).
    b1 is accepted for interface fidelity but is mathematically dead under
    train-mode BN and is not DMA'd into the kernel."""
    N, Dx = x.shape
    assert Dx == D
    del b1  # cancelled exactly by train-mode BatchNorm mean subtraction
    w1 = w1.astype(jnp.bfloat16)
    w2 = w2.astype(jnp.bfloat16)
    gamma = gamma.reshape(1, D).astype(jnp.float32)
    beta = beta.reshape(1, D).astype(jnp.float32)
    b2 = b2.reshape(1, D).astype(jnp.float32)

    bn = min(block_n, _round_up(N, 8))
    n_pad = _round_up(N, bn)
    nb = n_pad // bn
    if n_pad != N:
        # Zero rows contribute nothing to sum/sumsq (no b1 in pass 1), so the
        # BN statistics stay exact; padded output rows are sliced off below.
        x = jnp.pad(x, ((0, n_pad - N), (0, 0)))

    cp = pltpu.CompilerParams(
        dimension_semantics=("parallel",),
        vmem_limit_bytes=32 << 20,   # <= v7x's 64 MiB/TC; ample headroom
    )

    # ---- Pass 1 ----
    h, stats = pl.pallas_call(
        _linear1_stats_kernel,
        out_shape=(jax.ShapeDtypeStruct((n_pad, D), jnp.float32),
                   jax.ShapeDtypeStruct((nb, 2, D), jnp.float32)),
        grid=(nb,),
        in_specs=[pl.BlockSpec((bn, D), lambda i: (i, 0)),
                  pl.BlockSpec((D, D), lambda i: (0, 0))],      # pinned weight
        out_specs=(pl.BlockSpec((bn, D), lambda i: (i, 0)),
                   pl.BlockSpec((None, 2, D), lambda i: (i, 0, 0))),
        compiler_params=cp,
    )(x, w1)

    # Full-batch (biased) train-mode BN statistics, fused into scale/shift.
    s1 = jnp.sum(stats[:, 0, :], axis=0, keepdims=True)    # (1, D)
    s2 = jnp.sum(stats[:, 1, :], axis=0, keepdims=True)    # (1, D)
    mean = s1 / N
    var = s2 / N - mean * mean
    scale = gamma * jax.lax.rsqrt(var + EPS)                # (1, D)
    shift = beta - mean * scale                             # (1, D)

    # ---- Pass 2 ----
    out = pl.pallas_call(
        _bn_relu_linear2_kernel,
        out_shape=jax.ShapeDtypeStruct((n_pad, D), jnp.float32),
        grid=(nb,),
        in_specs=[pl.BlockSpec((bn, D), lambda i: (i, 0)),
                  pl.BlockSpec((1, D), lambda i: (0, 0)),
                  pl.BlockSpec((1, D), lambda i: (0, 0)),
                  pl.BlockSpec((D, D), lambda i: (0, 0)),       # pinned weight
                  pl.BlockSpec((1, D), lambda i: (0, 0))],
        out_specs=pl.BlockSpec((bn, D), lambda i: (i, 0)),
        compiler_params=cp,
    )(h, scale, shift, w2, b2)

    return out[:N]


def init_params(key):
    """nn.Linear-style init (uniform +-1/sqrt(fan_in)); Linear weights returned
    pre-transposed to (in, out) and quantized to bf16 (the stored format fed to
    the MXU).  BatchNorm gamma=1, beta=0."""
    k1, k2, k3, k4 = jax.random.split(key, 4)
    bound = 1.0 / jnp.sqrt(jnp.float32(D))
    w1 = jax.random.uniform(k1, (D, D), jnp.float32, -bound, bound).T
    b1 = jax.random.uniform(k2, (1, D), jnp.float32, -bound, bound)
    w2 = jax.random.uniform(k3, (D, D), jnp.float32, -bound, bound).T
    b2 = jax.random.uniform(k4, (1, D), jnp.float32, -bound, bound)
    gamma = jnp.ones((1, D), jnp.float32)
    beta = jnp.zeros((1, D), jnp.float32)
    return w1.astype(jnp.bfloat16), b1, gamma, beta, w2.astype(jnp.bfloat16), b2


def reference(x, w1, b1, gamma, beta, w2, b2):
    """Pure-JAX f32 reference of the torch module (train-mode BN, includes b1)."""
    w1 = w1.astype(jnp.float32)
    w2 = w2.astype(jnp.float32)
    h = x @ w1 + b1
    mean = jnp.mean(h, axis=0, keepdims=True)
    var = jnp.mean((h - mean) ** 2, axis=0, keepdims=True)
    z = (h - mean) / jnp.sqrt(var + EPS) * gamma + beta
    a = jnp.maximum(z, 0.0)
    return a @ w2 + b2


if __name__ == "__main__":
    key = jax.random.PRNGKey(0)
    kx, kp = jax.random.split(key)
    N = 8
    x = jax.random.normal(kx, (N, D), jnp.float32)
    params = init_params(kp)

    out = jax.block_until_ready(mlp_proj(x, *params))
    ref = reference(x, *params)

    assert out.shape == (N, D)
    # Tolerance accounts for casting the dot operands (activations) to bf16;
    # weights are identical bf16 values in kernel and reference.
    err = float(jnp.max(jnp.abs(out - ref)))
    assert jnp.allclose(out, ref, atol=5e-3, rtol=5e-3), err
    print("KERNEL_OK")
</pallas_src>

<mosaic_0001>
module attributes {stable_mosaic.version = 11 : i64} {
  func.func @_linear1_stats_kernel(%arg0: i32, %arg1: memref<8x960xf32, #tpu.memory_space<vmem>>, %arg2: memref<960x960xbf16, #tpu.memory_space<vmem>>, %arg3: memref<8x960xf32, #tpu.memory_space<vmem>>, %arg4: memref<1x2x960xf32, #tpu.memory_space<vmem>>) attributes {dimension_semantics = [#tpu.dimension_semantics<parallel>], iteration_bounds = array<i64: 1>, scalar_prefetch = 0 : i64, scratch_operands = 0 : i64, tpu.core_type = #tpu.core_type<tc>, window_params = [{transform_indices = @transform_0, window_bounds = array<i64: 8, 960>}, {pipeline_mode = #tpu.pipeline_mode<synchronous>, transform_indices = @transform_1, window_bounds = array<i64: 960, 960>}, {transform_indices = @transform_2, window_bounds = array<i64: 8, 960>}, {transform_indices = @transform_3, window_bounds = array<i64: 1, 2, 960>}]} {
    %c0 = arith.constant 0 : index
    %c0_0 = arith.constant 0 : index
    %0 = vector.load %arg1[%c0, %c0_0] : memref<8x960xf32, #tpu.memory_space<vmem>>, vector<8x960xf32>
    %1 = arith.truncf %0 : vector<8x960xf32> to vector<8x960xbf16>
    %c0_1 = arith.constant 0 : index
    %c0_2 = arith.constant 0 : index
    %2 = vector.load %arg2[%c0_1, %c0_2] : memref<960x960xbf16, #tpu.memory_space<vmem>>, vector<960x960xbf16>
    %cst = arith.constant dense<0.000000e+00> : vector<8x960xf32>
    %3 = tpu.matmul %1, %2, %cst {dimension_numbers = #tpu.dot_dimension_numbers<[1], [0], [0], [1], [0, 0, 1, 1], [], []>} : vector<8x960xbf16>, vector<960x960xbf16>, vector<8x960xf32> -> vector<8x960xf32>
    %c0_3 = arith.constant 0 : index
    %c0_4 = arith.constant 0 : index
    %4 = vector.load %arg3[%c0_3, %c0_4] : memref<8x960xf32, #tpu.memory_space<vmem>>, vector<8x960xf32>
    tpu.vector_store %arg3[%c0_3, %c0_4], %3 {strides = array<i32>} : memref<8x960xf32, #tpu.memory_space<vmem>>, vector<8x960xf32>,
    %cst_5 = arith.constant dense<0.000000e+00> : vector<960xf32>
    %5 = vector.multi_reduction <add>, %3, %cst_5 [0] : vector<8x960xf32> to vector<960xf32>
    %6 = vector.shape_cast %5 : vector<960xf32> to vector<1x960xf32>
    %c0_6 = arith.constant 0 : index
    %c0_7 = arith.constant 0 : index
    %c0_8 = arith.constant 0 : index
    %7 = vector.load %arg4[%c0_6, %c0_7, %c0_8] : memref<1x2x960xf32, #tpu.memory_space<vmem>>, vector<1x1x960xf32>
    %8 = vector.shape_cast %7 : vector<1x1x960xf32> to vector<1x960xf32>
    %9 = vector.shape_cast %6 : vector<1x960xf32> to vector<1x1x960xf32>
    tpu.vector_store %arg4[%c0_6, %c0_7, %c0_8], %9 {strides = array<i32>} : memref<1x2x960xf32, #tpu.memory_space<vmem>>, vector<1x1x960xf32>,
    %10 = arith.mulf %3, %3 : vector<8x960xf32>
    %cst_9 = arith.constant dense<0.000000e+00> : vector<960xf32>
    %11 = vector.multi_reduction <add>, %10, %cst_9 [0] : vector<8x960xf32> to vector<960xf32>
    %12 = vector.shape_cast %11 : vector<960xf32> to vector<1x960xf32>
    %c0_10 = arith.constant 0 : index
    %c1 = arith.constant 1 : index
    %c0_11 = arith.constant 0 : index
    %13 = vector.load %arg4[%c0_10, %c1, %c0_11] : memref<1x2x960xf32, #tpu.memory_space<vmem>>, vector<1x1x960xf32>
    %14 = vector.shape_cast %13 : vector<1x1x960xf32> to vector<1x960xf32>
    %15 = vector.shape_cast %12 : vector<1x960xf32> to vector<1x1x960xf32>
    tpu.vector_store %arg4[%c0_10, %c1, %c0_11], %15 {strides = array<i32>} : memref<1x2x960xf32, #tpu.memory_space<vmem>>, vector<1x1x960xf32>,
    return
  }
  func.func @transform_0(%arg0: i32) -> (i32, i32) {
    %c0_i32 = arith.constant 0 : i32
    %c0_i32_0 = arith.constant 0 : i32
    return %arg0, %c0_i32 : i32, i32
  }
  func.func @transform_1(%arg0: i32) -> (i32, i32) {
    %c0_i32 = arith.constant 0 : i32
    %c0_i32_0 = arith.constant 0 : i32
    %c0_i32_1 = arith.constant 0 : i32
    return %c0_i32, %c0_i32_0 : i32, i32
  }
  func.func @transform_2(%arg0: i32) -> (i32, i32) {
    %c0_i32 = arith.constant 0 : i32
    %c0_i32_0 = arith.constant 0 : i32
    return %arg0, %c0_i32 : i32, i32
  }
  func.func @transform_3(%arg0: i32) -> (i32, i32, i32) {
    %c0_i32 = arith.constant 0 : i32
    %c0_i32_0 = arith.constant 0 : i32
    %c0_i32_1 = arith.constant 0 : i32
    return %arg0, %c0_i32, %c0_i32_0 : i32, i32, i32
  }
}

</mosaic_0001>

<llo_original>
// kernel: tpu_custom_call.1
$region0: #{tpu_custom_call.1}
  #allocation0 [shape = 'u32[]', space=smem, size = 0x4, offset = 0x4, fixed_abs, tag = 'smem constant byte address 0x4 - core index']
  #allocation1 [shape = 'u32[144,128]{1,0:T(1,128)}', space=vmem, size = 0x12000, scoped, tag = 'internal scratch']
  %s0 = inlined_call_operand.hbm [shape: f32[8,960], index: 0, kind: input, shape index: {}]
  %s1 = inlined_call_operand.hbm [shape: bf16[960,960], index: 1, kind: input, shape index: {}]
  %s2 = inlined_call_operand.hbm [shape: f32[8,960], index: 2, kind: output, shape index: {0}]
  %s3 = inlined_call_operand.hbm [shape: f32[1,2,960], index: 3, kind: output, shape index: {1}]
  %4 = xla_tuple %s2, %s3
  %s5 = sld [smem:[#allocation0]]
  $region34: #{tpu_custom_call.1} parent=0
    _
  %s7 = ssub.s32 1, %s5
  %s8 = scalar_select 0, %s7, %s5
  $region1: #{tpu_custom_call.1} parent=0
    #allocation2 [shape = 'u8[32768]{0}', space=vmem, size = 0x8000, scoped, tag = 'input window, operand 0, single buffered']
    #allocation3 [shape = 's32[1]{0}', space=sflag, size = 0x4, scoped, tag = 'scoped memory for tpu_custom_call.1']
    #allocation4 [shape = 's32[1]{0}', space=sflag, size = 0x4, scoped, tag = 'scoped memory for tpu_custom_call.1']
    #allocation5 [shape = 'u8[1966080]{0}', space=vmem, size = 0x1e0000, scoped, tag = 'input window, operand 1, single buffered']
    #allocation6 [shape = 's32[1]{0}', space=sflag, size = 0x4, scoped, tag = 'scoped memory for tpu_custom_call.1']
    #allocation7 [shape = 'u8[32768]{0}', space=vmem, size = 0x8000, scoped, tag = 'output window, operand 0, single buffered']
    #allocation8 [shape = 'u8[8192]{0}', space=vmem, size = 0x2000, scoped, tag = 'output window, operand 1, single buffered']
    #allocation9 [shape = 's32[1]{0}', space=sflag, size = 0x4, scoped, tag = 'scoped memory for tpu_custom_call.1']
    %9 = vsyncpa [#allocation3], 0
    %10 = vsyncpa [#allocation6], 0
    %11 = vsyncpa [#allocation4], 0
    %12 = vsyncpa [#allocation9], 0
    // Predicated region
    $region2: #{tpu_custom_call.1} parent=1 // pred_check
      _
    $region3: #{tpu_custom_call.1} parent=1 // pred_check_branch
      %14 = sbr.rel (0) target = $region5
    $region4: #{tpu_custom_call.1} parent=1 // pred_region
      %s16 = ssub.s32 1024, 1024
      %17 = vsyncadd [#allocation3], %s16
      %s19 = sshll.u32 [#allocation2], 4
      %s20 = int_to_ptr.vmem [resolvable:$true] %s19
      %22 = dma.hbm_to_vmem [thread:$0]  %s0, 1024, %s20, [#allocation3]
    $region5: #{tpu_custom_call.1} parent=1 // pred_fallthru
      _
    // Predicated region
    $region6: #{tpu_custom_call.1} parent=1 // pred_check
      _
    $region7: #{tpu_custom_call.1} parent=1 // pred_check_branch
      %24 = sbr.rel (0) target = $region9
    $region8: #{tpu_custom_call.1} parent=1 // pred_region
      %s26 = ssub.s32 61440, 61440
      %27 = vsyncadd [#allocation6], %s26
      %s28 = sshll.u32 [#allocation5], 4
      %s29 = int_to_ptr.vmem [resolvable:$true] %s28
      %34 = dma.hbm_to_vmem [thread:$0]  %s1, 61440, %s29, [#allocation6], 512, 512, 32
    $region9: #{tpu_custom_call.1} parent=1 // pred_fallthru
      _
    // Predicated region
    $region10: #{tpu_custom_call.1} parent=1 // pred_check
      _
    $region11: #{tpu_custom_call.1} parent=1 // pred_check_branch
      %36 = sbr.rel (0) target = $region13
    $region12: #{tpu_custom_call.1} parent=1 // pred_region
      %37 = dma.done [#allocation3], 1024
    $region13: #{tpu_custom_call.1} parent=1 // pred_fallthru
      _
    // Predicated region
    $region14: #{tpu_custom_call.1} parent=1 // pred_check
      _
    $region15: #{tpu_custom_call.1} parent=1 // pred_check_branch
      %39 = sbr.rel (0) target = $region17
    $region16: #{tpu_custom_call.1} parent=1 // pred_region
      %40 = dma.done [#allocation6], 61440
    $region17: #{tpu_custom_call.1} parent=1 // pred_fallthru
      _
    %v42 = vld [vmem:[#allocation2] sm:$0xff]
    %v43 = vld [vmem:[#allocation2 + $0x8] sm:$0xff]
    %v44 = vld [vmem:[#allocation2 + $0x10] sm:$0xff]
    %v45 = vld [vmem:[#allocation2 + $0x18] sm:$0xff]
    %v46 = vld [vmem:[#allocation2 + $0x20] sm:$0xff]
    %v47 = vld [vmem:[#allocation2 + $0x28] sm:$0xff]
    %v48 = vld [vmem:[#allocation2 + $0x30] sm:$0xff]
    %v49 = vld [vmem:[#allocation2 + $0x38] sm:$0xff]
    %v50 = vpack.c.bf16 %v42, %v42
    %v51 = vpack.c.bf16 %v43, %v43
    %v52 = vpack.c.bf16 %v44, %v44
    %v53 = vpack.c.bf16 %v45, %v45
    %v54 = vpack.c.bf16 %v46, %v46
    %v55 = vpack.c.bf16 %v47, %v47
    %v56 = vpack.c.bf16 %v48, %v48
    %v57 = vpack.c.bf16 %v49, %v49
    %v58 = vld [vmem:[#allocation5] sm:$0xff]
    %v59 = vld [vmem:[#allocation5 + $0x8] sm:$0xff]
    %v60 = vld [vmem:[#allocation5 + $0x10] sm:$0xff]
    %v61 = vld [vmem:[#allocation5 + $0x18] sm:$0xff]
    %v62 = vld [vmem:[#allocation5 + $0x20] sm:$0xff]
    %v63 = vld [vmem:[#allocation5 + $0x28] sm:$0xff]
    %v64 = vld [vmem:[#allocation5 + $0x30] sm:$0xff]
    %v65 = vld [vmem:[#allocation5 + $0x38] sm:$0xff]
    %v66 = vld [vmem:[#allocation5 + $0x40] sm:$0xff]
    %v67 = vld [vmem:[#allocation5 + $0x48] sm:$0xff]
    %v68 = vld [vmem:[#allocation5 + $0x50] sm:$0xff]
    %v69 = vld [vmem:[#allocation5 + $0x58] sm:$0xff]
    %v70 = vld [vmem:[#allocation5 + $0x60] sm:$0xff]
    %v71 = vld [vmem:[#allocation5 + $0x68] sm:$0xff]
    %v72 = vld [vmem:[#allocation5 + $0x70] sm:$0xff]
    %v73 = vld [vmem:[#allocation5 + $0x78] sm:$0xff]
    %v74 = vld [vmem:[#allocation5 + $0x80] sm:$0xff]
    %v75 = vld [vmem:[#allocation5 + $0x88] sm:$0xff]
    %v76 = vld [vmem:[#allocation5 + $0x90] sm:$0xff]
    %v77 = vld [vmem:[#allocation5 + $0x98] sm:$0xff]
    %v78 = vld [vmem:[#allocation5 + $0xa0] sm:$0xff]
    %v79 = vld [vmem:[#allocation5 + $0xa8] sm:$0xff]
    %v80 = vld [vmem:[#allocation5 + $0xb0] sm:$0xff]
    %v81 = vld [vmem:[#allocation5 + $0xb8] sm:$0xff]
    %v82 = vld [vmem:[#allocation5 + $0xc0] sm:$0xff]
    %v83 = vld [vmem:[#allocation5 + $0xc8] sm:$0xff]
    %v84 = vld [vmem:[#allocation5 + $0xd0] sm:$0xff]
    %v85 = vld [vmem:[#allocation5 + $0xd8] sm:$0xff]
    %v86 = vld [vmem:[#allocation5 + $0xe0] sm:$0xff]
    %v87 = vld [vmem:[#allocation5 + $0xe8] sm:$0xff]
    %v88 = vld [vmem:[#allocation5 + $0xf0] sm:$0xff]
    %v89 = vld [vmem:[#allocation5 + $0xf8] sm:$0xff]
    %v90 = vld [vmem:[#allocation5 + $0x100] sm:$0xff]
    %v91 = vld [vmem:[#allocation5 + $0x108] sm:$0xff]
    %v92 = vld [vmem:[#allocation5 + $0x110] sm:$0xff]
    %v93 = vld [vmem:[#allocation5 + $0x118] sm:$0xff]
    %v94 = vld [vmem:[#allocation5 + $0x120] sm:$0xff]
    %v95 = vld [vmem:[#allocation5 + $0x128] sm:$0xff]
    %v96 = vld [vmem:[#allocation5 + $0x130] sm:$0xff]
    %v97 = vld [vmem:[#allocation5 + $0x138] sm:$0xff]
    %v98 = vld [vmem:[#allocation5 + $0x140] sm:$0xff]
    %v99 = vld [vmem:[#allocation5 + $0x148] sm:$0xff]
    %v100 = vld [vmem:[#allocation5 + $0x150] sm:$0xff]
    %v101 = vld [vmem:[#allocation5 + $0x158] sm:$0xff]
    %v102 = vld [vmem:[#allocation5 + $0x160] sm:$0xff]
    %v103 = vld [vmem:[#allocation5 + $0x168] sm:$0xff]
    %v104 = vld [vmem:[#allocation5 + $0x170] sm:$0xff]
    %v105 = vld [vmem:[#allocation5 + $0x178] sm:$0xff]
    %v106 = vld [vmem:[#allocation5 + $0x180] sm:$0xff]
    %v107 = vld [vmem:[#allocation5 + $0x188] sm:$0xff]
    %v108 = vld [vmem:[#allocation5 + $0x190] sm:$0xff]
    %v109 = vld [vmem:[#allocation5 + $0x198] sm:$0xff]
    %v110 = vld [vmem:[#allocation5 + $0x1a0] sm:$0xff]
    %v111 = vld [vmem:[#allocation5 + $0x1a8] sm:$0xff]
    %v112 = vld [vmem:[#allocation5 + $0x1b0] sm:$0xff]
    %v113 = vld [vmem:[#allocation5 + $0x1b8] sm:$0xff]
    %v114 = vld [vmem:[#allocation5 + $0x1c0] sm:$0xff]
    %v115 = vld [vmem:[#allocation5 + $0x1c8] sm:$0xff]
    %v116 = vld [vmem:[#allocation5 + $0x1d0] sm:$0xff]
    %v117 = vld [vmem:[#allocation5 + $0x1d8] sm:$0xff]
    %v118 = vld [vmem:[#allocation5 + $0x1e0] sm:$0xff]
    %v119 = vld [vmem:[#allocation5 + $0x1e8] sm:$0xff]
    %v120 = vld [vmem:[#allocation5 + $0x1f0] sm:$0xff]
    %v121 = vld [vmem:[#allocation5 + $0x1f8] sm:$0xff]
    %v122 = vld [vmem:[#allocation5 + $0x200] sm:$0xff]
    %v123 = vld [vmem:[#allocation5 + $0x208] sm:$0xff]
    %v124 = vld [vmem:[#allocation5 + $0x210] sm:$0xff]
    %v125 = vld [vmem:[#allocation5 + $0x218] sm:$0xff]
    %v126 = vld [vmem:[#allocation5 + $0x220] sm:$0xff]
    %v127 = vld [vmem:[#allocation5 + $0x228] sm:$0xff]
    %v128 = vld [vmem:[#allocation5 + $0x230] sm:$0xff]
    %v129 = vld [vmem:[#allocation5 + $0x238] sm:$0xff]
    %v130 = vld [vmem:[#allocation5 + $0x240] sm:$0xff]
    %v131 = vld [vmem:[#allocation5 + $0x248] sm:$0xff]
    %v132 = vld [vmem:[#allocation5 + $0x250] sm:$0xff]
    %v133 = vld [vmem:[#allocation5 + $0x258] sm:$0xff]
    %v134 = vld [vmem:[#allocation5 + $0x260] sm:$0xff]
    %v135 = vld [vmem:[#allocation5 + $0x268] sm:$0xff]
    %v136 = vld [vmem:[#allocation5 + $0x270] sm:$0xff]
    %v137 = vld [vmem:[#allocation5 + $0x278] sm:$0xff]
    %v138 = vld [vmem:[#allocation5 + $0x280] sm:$0xff]
    %v139 = vld [vmem:[#allocation5 + $0x288] sm:$0xff]
    %v140 = vld [vmem:[#allocation5 + $0x290] sm:$0xff]
    %v141 = vld [vmem:[#allocation5 + $0x298] sm:$0xff]
    %v142 = vld [vmem:[#allocation5 + $0x2a0] sm:$0xff]
    %v143 = vld [vmem:[#allocation5 + $0x2a8] sm:$0xff]
    %v144 = vld [vmem:[#allocation5 + $0x2b0] sm:$0xff]
    %v145 = vld [vmem:[#allocation5 + $0x2b8] sm:$0xff]
    %v146 = vld [vmem:[#allocation5 + $0x2c0] sm:$0xff]
    %v147 = vld [vmem:[#allocation5 + $0x2c8] sm:$0xff]
    %v148 = vld [vmem:[#allocation5 + $0x2d0] sm:$0xff]
    %v149 = vld [vmem:[#allocation5 + $0x2d8] sm:$0xff]
    %v150 = vld [vmem:[#allocation5 + $0x2e0] sm:$0xff]
    %v151 = vld [vmem:[#allocation5 + $0x2e8] sm:$0xff]
    %v152 = vld [vmem:[#allocation5 + $0x2f0] sm:$0xff]
    %v153 = vld [vmem:[#allocation5 + $0x2f8] sm:$0xff]
    %v154 = vld [vmem:[#allocation5 + $0x300] sm:$0xff]
    %v155 = vld [vmem:[#allocation5 + $0x308] sm:$0xff]
    %v156 = vld [vmem:[#allocation5 + $0x310] sm:$0xff]
    %v157 = vld [vmem:[#allocation5 + $0x318] sm:$0xff]
    %v158 = vld [vmem:[#allocation5 + $0x320] sm:$0xff]
    %v159 = vld [vmem:[#allocation5 + $0x328] sm:$0xff]
    %v160 = vld [vmem:[#allocation5 + $0x330] sm:$0xff]
    %v161 = vld [vmem:[#allocation5 + $0x338] sm:$0xff]
    %v162 = vld [vmem:[#allocation5 + $0x340] sm:$0xff]
    %v163 = vld [vmem:[#allocation5 + $0x348] sm:$0xff]
    %v164 = vld [vmem:[#allocation5 + $0x350] sm:$0xff]
    %v165 = vld [vmem:[#allocation5 + $0x358] sm:$0xff]
    %v166 = vld [vmem:[#allocation5 + $0x360] sm:$0xff]
    %v167 = vld [vmem:[#allocation5 + $0x368] sm:$0xff]
    %v168 = vld [vmem:[#allocation5 + $0x370] sm:$0xff]
    %v169 = vld [vmem:[#allocation5 + $0x378] sm:$0xff]
    %v170 = vld [vmem:[#allocation5 + $0x380] sm:$0xff]
    %v171 = vld [vmem:[#allocation5 + $0x388] sm:$0xff]
    %v172 = vld [vmem:[#allocation5 + $0x390] sm:$0xff]
    %v173 = vld [vmem:[#allocation5 + $0x398] sm:$0xff]
    %v174 = vld [vmem:[#allocation5 + $0x3a0] sm:$0xff]
    %v175 = vld [vmem:[#allocation5 + $0x3a8] sm:$0xff]
    %v176 = vld [vmem:[#allocation5 + $0x3b0] sm:$0xff]
    %v177 = vld [vmem:[#allocation5 + $0x3b8] sm:$0xff]
    %v178 = vld [vmem:[#allocation5 + $0x3c0] sm:$0xff]
    %v179 = vld [vmem:[#allocation5 + $0x3c8] sm:$0xff]
    %v180 = vld [vmem:[#allocation5 + $0x3d0] sm:$0xff]
    %v181 = vld [vmem:[#allocation5 + $0x3d8] sm:$0xff]
    %v182 = vld [vmem:[#allocation5 + $0x3e0] sm:$0xff]
    %v183 = vld [vmem:[#allocation5 + $0x3e8] sm:$0xff]
    %v184 = vld [vmem:[#allocation5 + $0x3f0] sm:$0xff]
    %v185 = vld [vmem:[#allocation5 + $0x3f8] sm:$0xff]
    %v186 = vld [vmem:[#allocation5 + $0x400] sm:$0xff]
    %v187 = vld [vmem:[#allocation5 + $0x408] sm:$0xff]
    %v188 = vld [vmem:[#allocation5 + $0x410] sm:$0xff]
    %v189 = vld [vmem:[#allocation5 + $0x418] sm:$0xff]
    %v190 = vld [vmem:[#allocation5 + $0x420] sm:$0xff]
    %v191 = vld [vmem:[#allocation5 + $0x428] sm:$0xff]
    %v192 = vld [vmem:[#allocation5 + $0x430] sm:$0xff]
    %v193 = vld [vmem:[#allocation5 + $0x438] sm:$0xff]
    %v194 = vld [vmem:[#allocation5 + $0x440] sm:$0xff]
    %v195 = vld [vmem:[#allocation5 + $0x448] sm:$0xff]
    %v196 = vld [vmem:[#allocation5 + $0x450] sm:$0xff]
    %v197 = vld [vmem:[#allocation5 + $0x458] sm:$0xff]
    %v198 = vld [vmem:[#allocation5 + $0x460] sm:$0xff]
    %v199 = vld [vmem:[#allocation5 + $0x468] sm:$0xff]
    %v200 = vld [vmem:[#allocation5 + $0x470] sm:$0xff]
    %v201 = vld [vmem:[#allocation5 + $0x478] sm:$0xff]
    %v202 = vld [vmem:[#allocation5 + $0x480] sm:$0xff]
    %v203 = vld [vmem:[#allocation5 + $0x488] sm:$0xff]
    %v204 = vld [vmem:[#allocation5 + $0x490] sm:$0xff]
    %v205 = vld [vmem:[#allocation5 + $0x498] sm:$0xff]
    %v206 = vld [vmem:[#allocation5 + $0x4a0] sm:$0xff]
    %v207 = vld [vmem:[#allocation5 + $0x4a8] sm:$0xff]
    %v208 = vld [vmem:[#allocation5 + $0x4b0] sm:$0xff]
    %v209 = vld [vmem:[#allocation5 + $0x4b8] sm:$0xff]
    %v210 = vld [vmem:[#allocation5 + $0x4c0] sm:$0xff]
    %v211 = vld [vmem:[#allocation5 + $0x4c8] sm:$0xff]
    %v212 = vld [vmem:[#allocation5 + $0x4d0] sm:$0xff]
    %v213 = vld [vmem:[#allocation5 + $0x4d8] sm:$0xff]
    %v214 = vld [vmem:[#allocation5 + $0x4e0] sm:$0xff]
    %v215 = vld [vmem:[#allocation5 + $0x4e8] sm:$0xff]
    %v216 = vld [vmem:[#allocation5 + $0x4f0] sm:$0xff]
    %v217 = vld [vmem:[#allocation5 + $0x4f8] sm:$0xff]
    %v218 = vld [vmem:[#allocation5 + $0x500] sm:$0xff]
    %v219 = vld [vmem:[#allocation5 + $0x508] sm:$0xff]
    %v220 = vld [vmem:[#allocation5 + $0x510] sm:$0xff]
    %v221 = vld [vmem:[#allocation5 + $0x518] sm:$0xff]
    %v222 = vld [vmem:[#allocation5 + $0x520] sm:$0xff]
    %v223 = vld [vmem:[#allocation5 + $0x528] sm:$0xff]
    %v224 = vld [vmem:[#allocation5 + $0x530] sm:$0xff]
    %v225 = vld [vmem:[#allocation5 + $0x538] sm:$0xff]
    %v226 = vld [vmem:[#allocation5 + $0x540] sm:$0xff]
    %v227 = vld [vmem:[#allocation5 + $0x548] sm:$0xff]
    %v228 = vld [vmem:[#allocation5 + $0x550] sm:$0xff]
    %v229 = vld [vmem:[#allocation5 + $0x558] sm:$0xff]
    %v230 = vld [vmem:[#allocation5 + $0x560] sm:$0xff]
    %v231 = vld [vmem:[#allocation5 + $0x568] sm:$0xff]
    %v232 = vld [vmem:[#allocation5 + $0x570] sm:$0xff]
    %v233 = vld [vmem:[#allocation5 + $0x578] sm:$0xff]
    %v234 = vld [vmem:[#allocation5 + $0x580] sm:$0xff]
    %v235 = vld [vmem:[#allocation5 + $0x588] sm:$0xff]
    %v236 = vld [vmem:[#allocation5 + $0x590] sm:$0xff]
    %v237 = vld [vmem:[#allocation5 + $0x598] sm:$0xff]
    %v238 = vld [vmem:[#allocation5 + $0x5a0] sm:$0xff]
    %v239 = vld [vmem:[#allocation5 + $0x5a8] sm:$0xff]
    %v240 = vld [vmem:[#allocation5 + $0x5b0] sm:$0xff]
    %v241 = vld [vmem:[#allocation5 + $0x5b8] sm:$0xff]
    %v242 = vld [vmem:[#allocation5 + $0x5c0] sm:$0xff]
    %v243 = vld [vmem:[#allocation5 + $0x5c8] sm:$0xff]
    %v244 = vld [vmem:[#allocation5 + $0x5d0] sm:$0xff]
    %v245 = vld [vmem:[#allocation5 + $0x5d8] sm:$0xff]
    %v246 = vld [vmem:[#allocation5 + $0x5e0] sm:$0xff]
    %v247 = vld [vmem:[#allocation5 + $0x5e8] sm:$0xff]
    %v248 = vld [vmem:[#allocation5 + $0x5f0] sm:$0xff]
    %v249 = vld [vmem:[#allocation5 + $0x5f8] sm:$0xff]
    %v250 = vld [vmem:[#allocation5 + $0x600] sm:$0xff]
    %v251 = vld [vmem:[#allocation5 + $0x608] sm:$0xff]
    %v252 = vld [vmem:[#allocation5 + $0x610] sm:$0xff]
    %v253 = vld [vmem:[#allocation5 + $0x618] sm:$0xff]
    %v254 = vld [vmem:[#allocation5 + $0x620] sm:$0xff]
    %v255 = vld [vmem:[#allocation5 + $0x628] sm:$0xff]
    %v256 = vld [vmem:[#allocation5 + $0x630] sm:$0xff]
    %v257 = vld [vmem:[#allocation5 + $0x638] sm:$0xff]
    %v258 = vld [vmem:[#allocation5 + $0x640] sm:$0xff]
    %v259 = vld [vmem:[#allocation5 + $0x648] sm:$0xff]
    %v260 = vld [vmem:[#allocation5 + $0x650] sm:$0xff]
    %v261 = vld [vmem:[#allocation5 + $0x658] sm:$0xff]
    %v262 = vld [vmem:[#allocation5 + $0x660] sm:$0xff]
    %v263 = vld [vmem:[#allocation5 + $0x668] sm:$0xff]
    %v264 = vld [vmem:[#allocation5 + $0x670] sm:$0xff]
    %v265 = vld [vmem:[#allocation5 + $0x678] sm:$0xff]
    %v266 = vld [vmem:[#allocation5 + $0x680] sm:$0xff]
    %v267 = vld [vmem:[#allocation5 + $0x688] sm:$0xff]
    %v268 = vld [vmem:[#allocation5 + $0x690] sm:$0xff]
    %v269 = vld [vmem:[#allocation5 + $0x698] sm:$0xff]
    %v270 = vld [vmem:[#allocation5 + $0x6a0] sm:$0xff]
    %v271 = vld [vmem:[#allocation5 + $0x6a8] sm:$0xff]
    %v272 = vld [vmem:[#allocation5 + $0x6b0] sm:$0xff]
    %v273 = vld [vmem:[#allocation5 + $0x6b8] sm:$0xff]
    %v274 = vld [vmem:[#allocation5 + $0x6c0] sm:$0xff]
    %v275 = vld [vmem:[#allocation5 + $0x6c8] sm:$0xff]
    %v276 = vld [vmem:[#allocation5 + $0x6d0] sm:$0xff]
    %v277 = vld [vmem:[#allocation5 + $0x6d8] sm:$0xff]
    %v278 = vld [vmem:[#allocation5 + $0x6e0] sm:$0xff]
    %v279 = vld [vmem:[#allocation5 + $0x6e8] sm:$0xff]
    %v280 = vld [vmem:[#allocation5 + $0x6f0] sm:$0xff]
    %v281 = vld [vmem:[#allocation5 + $0x6f8] sm:$0xff]
    %v282 = vld [vmem:[#allocation5 + $0x700] sm:$0xff]
    %v283 = vld [vmem:[#allocation5 + $0x708] sm:$0xff]
    %v284 = vld [vmem:[#allocation5 + $0x710] sm:$0xff]
    %v285 = vld [vmem:[#allocation5 + $0x718] sm:$0xff]
    %v286 = vld [vmem:[#allocation5 + $0x720] sm:$0xff]
    %v287 = vld [vmem:[#allocation5 + $0x728] sm:$0xff]
    %v288 = vld [vmem:[#allocation5 + $0x730] sm:$0xff]
    %v289 = vld [vmem:[#allocation5 + $0x738] sm:$0xff]
    %v290 = vld [vmem:[#allocation5 + $0x740] sm:$0xff]
    %v291 = vld [vmem:[#allocation5 + $0x748] sm:$0xff]
    %v292 = vld [vmem:[#allocation5 + $0x750] sm:$0xff]
    %v293 = vld [vmem:[#allocation5 + $0x758] sm:$0xff]
    %v294 = vld [vmem:[#allocation5 + $0x760] sm:$0xff]
    %v295 = vld [vmem:[#allocation5 + $0x768] sm:$0xff]
    %v296 = vld [vmem:[#allocation5 + $0x770] sm:$0xff]
    %v297 = vld [vmem:[#allocation5 + $0x778] sm:$0xff]
    %v298 = vld [vmem:[#allocation5 + $0x780] sm:$0xff]
    %v299 = vld [vmem:[#allocation5 + $0x788] sm:$0xff]
    %v300 = vld [vmem:[#allocation5 + $0x790] sm:$0xff]
    %v301 = vld [vmem:[#allocation5 + $0x798] sm:$0xff]
    %v302 = vld [vmem:[#allocation5 + $0x7a0] sm:$0xff]
    %v303 = vld [vmem:[#allocation5 + $0x7a8] sm:$0xff]
    %v304 = vld [vmem:[#allocation5 + $0x7b0] sm:$0xff]
    %v305 = vld [vmem:[#allocation5 + $0x7b8] sm:$0xff]
    %v306 = vld [vmem:[#allocation5 + $0x7c0] sm:$0xff]
    %v307 = vld [vmem:[#allocation5 + $0x7c8] sm:$0xff]
    %v308 = vld [vmem:[#allocation5 + $0x7d0] sm:$0xff]
    %v309 = vld [vmem:[#allocation5 + $0x7d8] sm:$0xff]
    %v310 = vld [vmem:[#allocation5 + $0x7e0] sm:$0xff]
    %v311 = vld [vmem:[#allocation5 + $0x7e8] sm:$0xff]
    %v312 = vld [vmem:[#allocation5 + $0x7f0] sm:$0xff]
    %v313 = vld [vmem:[#allocation5 + $0x7f8] sm:$0xff]
    %v314 = vld [vmem:[#allocation5 + $0x800] sm:$0xff]
    %v315 = vld [vmem:[#allocation5 + $0x808] sm:$0xff]
    %v316 = vld [vmem:[#allocation5 + $0x810] sm:$0xff]
    %v317 = vld [vmem:[#allocation5 + $0x818] sm:$0xff]
    %v318 = vld [vmem:[#allocation5 + $0x820] sm:$0xff]
    %v319 = vld [vmem:[#allocation5 + $0x828] sm:$0xff]
    %v320 = vld [vmem:[#allocation5 + $0x830] sm:$0xff]
    %v321 = vld [vmem:[#allocation5 + $0x838] sm:$0xff]
    %v322 = vld [vmem:[#allocation5 + $0x840] sm:$0xff]
    %v323 = vld [vmem:[#allocation5 + $0x848] sm:$0xff]
    %v324 = vld [vmem:[#allocation5 + $0x850] sm:$0xff]
    %v325 = vld [vmem:[#allocation5 + $0x858] sm:$0xff]
    %v326 = vld [vmem:[#allocation5 + $0x860] sm:$0xff]
    %v327 = vld [vmem:[#allocation5 + $0x868] sm:$0xff]
    %v328 = vld [vmem:[#allocation5 + $0x870] sm:$0xff]
    %v329 = vld [vmem:[#allocation5 + $0x878] sm:$0xff]
    %v330 = vld [vmem:[#allocation5 + $0x880] sm:$0xff]
    %v331 = vld [vmem:[#allocation5 + $0x888] sm:$0xff]
    %v332 = vld [vmem:[#allocation5 + $0x890] sm:$0xff]
    %v333 = vld [vmem:[#allocation5 + $0x898] sm:$0xff]
    %v334 = vld [vmem:[#allocation5 + $0x8a0] sm:$0xff]
    %v335 = vld [vmem:[#allocation5 + $0x8a8] sm:$0xff]
    %v336 = vld [vmem:[#allocation5 + $0x8b0] sm:$0xff]
    %v337 = vld [vmem:[#allocation5 + $0x8b8] sm:$0xff]
    %v338 = vld [vmem:[#allocation5 + $0x8c0] sm:$0xff]
    %v339 = vld [vmem:[#allocation5 + $0x8c8] sm:$0xff]
    %v340 = vld [vmem:[#allocation5 + $0x8d0] sm:$0xff]
    %v341 = vld [vmem:[#allocation5 + $0x8d8] sm:$0xff]
    %v342 = vld [vmem:[#allocation5 + $0x8e0] sm:$0xff]
    %v343 = vld [vmem:[#allocation5 + $0x8e8] sm:$0xff]
    %v344 = vld [vmem:[#allocation5 + $0x8f0] sm:$0xff]
    %v345 = vld [vmem:[#allocation5 + $0x8f8] sm:$0xff]
    %v346 = vld [vmem:[#allocation5 + $0x900] sm:$0xff]
    %v347 = vld [vmem:[#allocation5 + $0x908] sm:$0xff]
    %v348 = vld [vmem:[#allocation5 + $0x910] sm:$0xff]
    %v349 = vld [vmem:[#allocation5 + $0x918] sm:$0xff]
    %v350 = vld [vmem:[#allocation5 + $0x920] sm:$0xff]
    %v351 = vld [vmem:[#allocation5 + $0x928] sm:$0xff]
    %v352 = vld [vmem:[#allocation5 + $0x930] sm:$0xff]
    %v353 = vld [vmem:[#allocation5 + $0x938] sm:$0xff]
    %v354 = vld [vmem:[#allocation5 + $0x940] sm:$0xff]
    %v355 = vld [vmem:[#allocation5 + $0x948] sm:$0xff]
    %v356 = vld [vmem:[#allocation5 + $0x950] sm:$0xff]
    %v357 = vld [vmem:[#allocation5 + $0x958] sm:$0xff]
    %v358 = vld [vmem:[#allocation5 + $0x960] sm:$0xff]
    %v359 = vld [vmem:[#allocation5 + $0x968] sm:$0xff]
    %v360 = vld [vmem:[#allocation5 + $0x970] sm:$0xff]
    %v361 = vld [vmem:[#allocation5 + $0x978] sm:$0xff]
    %v362 = vld [vmem:[#allocation5 + $0x980] sm:$0xff]
    %v363 = vld [vmem:[#allocation5 + $0x988] sm:$0xff]
    %v364 = vld [vmem:[#allocation5 + $0x990] sm:$0xff]
    %v365 = vld [vmem:[#allocation5 + $0x998] sm:$0xff]
    %v366 = vld [vmem:[#allocation5 + $0x9a0] sm:$0xff]
    %v367 = vld [vmem:[#allocation5 + $0x9a8] sm:$0xff]
    %v368 = vld [vmem:[#allocation5 + $0x9b0] sm:$0xff]
    %v369 = vld [vmem:[#allocation5 + $0x9b8] sm:$0xff]
    %v370 = vld [vmem:[#allocation5 + $0x9c0] sm:$0xff]
    %v371 = vld [vmem:[#allocation5 + $0x9c8] sm:$0xff]
    %v372 = vld [vmem:[#allocation5 + $0x9d0] sm:$0xff]
    %v373 = vld [vmem:[#allocation5 + $0x9d8] sm:$0xff]
    %v374 = vld [vmem:[#allocation5 + $0x9e0] sm:$0xff]
    %v375 = vld [vmem:[#allocation5 + $0x9e8] sm:$0xff]
    %v376 = vld [vmem:[#allocation5 + $0x9f0] sm:$0xff]
    %v377 = vld [vmem:[#allocation5 + $0x9f8] sm:$0xff]
    %v378 = vld [vmem:[#allocation5 + $0xa00] sm:$0xff]
    %v379 = vld [vmem:[#allocation5 + $0xa08] sm:$0xff]
    %v380 = vld [vmem:[#allocation5 + $0xa10] sm:$0xff]
    %v381 = vld [vmem:[#allocation5 + $0xa18] sm:$0xff]
    %v382 = vld [vmem:[#allocation5 + $0xa20] sm:$0xff]
    %v383 = vld [vmem:[#allocation5 + $0xa28] sm:$0xff]
    %v384 = vld [vmem:[#allocation5 + $0xa30] sm:$0xff]
    %v385 = vld [vmem:[#allocation5 + $0xa38] sm:$0xff]
    %v386 = vld [vmem:[#allocation5 + $0xa40] sm:$0xff]
    %v387 = vld [vmem:[#allocation5 + $0xa48] sm:$0xff]
    %v388 = vld [vmem:[#allocation5 + $0xa50] sm:$0xff]
    %v389 = vld [vmem:[#allocation5 + $0xa58] sm:$0xff]
    %v390 = vld [vmem:[#allocation5 + $0xa60] sm:$0xff]
    %v391 = vld [vmem:[#allocation5 + $0xa68] sm:$0xff]
    %v392 = vld [vmem:[#allocation5 + $0xa70] sm:$0xff]
    %v393 = vld [vmem:[#allocation5 + $0xa78] sm:$0xff]
    %v394 = vld [vmem:[#allocation5 + $0xa80] sm:$0xff]
    %v395 = vld [vmem:[#allocation5 + $0xa88] sm:$0xff]
    %v396 = vld [vmem:[#allocation5 + $0xa90] sm:$0xff]
    %v397 = vld [vmem:[#allocation5 + $0xa98] sm:$0xff]
    %v398 = vld [vmem:[#allocation5 + $0xaa0] sm:$0xff]
    %v399 = vld [vmem:[#allocation5 + $0xaa8] sm:$0xff]
    %v400 = vld [vmem:[#allocation5 + $0xab0] sm:$0xff]
    %v401 = vld [vmem:[#allocation5 + $0xab8] sm:$0xff]
    %v402 = vld [vmem:[#allocation5 + $0xac0] sm:$0xff]
    %v403 = vld [vmem:[#allocation5 + $0xac8] sm:$0xff]
    %v404 = vld [vmem:[#allocation5 + $0xad0] sm:$0xff]
    %v405 = vld [vmem:[#allocation5 + $0xad8] sm:$0xff]
    %v406 = vld [vmem:[#allocation5 + $0xae0] sm:$0xff]
    %v407 = vld [vmem:[#allocation5 + $0xae8] sm:$0xff]
    %v408 = vld [vmem:[#allocation5 + $0xaf0] sm:$0xff]
    %v409 = vld [vmem:[#allocation5 + $0xaf8] sm:$0xff]
    %v410 = vld [vmem:[#allocation5 + $0xb00] sm:$0xff]
    %v411 = vld [vmem:[#allocation5 + $0xb08] sm:$0xff]
    %v412 = vld [vmem:[#allocation5 + $0xb10] sm:$0xff]
    %v413 = vld [vmem:[#allocation5 + $0xb18] sm:$0xff]
    %v414 = vld [vmem:[#allocation5 + $0xb20] sm:$0xff]
    %v415 = vld [vmem:[#allocation5 + $0xb28] sm:$0xff]
    %v416 = vld [vmem:[#allocation5 + $0xb30] sm:$0xff]
    %v417 = vld [vmem:[#allocation5 + $0xb38] sm:$0xff]
    %v418 = vld [vmem:[#allocation5 + $0xb40] sm:$0xff]
    %v419 = vld [vmem:[#allocation5 + $0xb48] sm:$0xff]
    %v420 = vld [vmem:[#allocation5 + $0xb50] sm:$0xff]
    %v421 = vld [vmem:[#allocation5 + $0xb58] sm:$0xff]
    %v422 = vld [vmem:[#allocation5 + $0xb60] sm:$0xff]
    %v423 = vld [vmem:[#allocation5 + $0xb68] sm:$0xff]
    %v424 = vld [vmem:[#allocation5 + $0xb70] sm:$0xff]
    %v425 = vld [vmem:[#allocation5 + $0xb78] sm:$0xff]
    %v426 = vld [vmem:[#allocation5 + $0xb80] sm:$0xff]
    %v427 = vld [vmem:[#allocation5 + $0xb88] sm:$0xff]
    %v428 = vld [vmem:[#allocation5 + $0xb90] sm:$0xff]
    %v429 = vld [vmem:[#allocation5 + $0xb98] sm:$0xff]
    %v430 = vld [vmem:[#allocation5 + $0xba0] sm:$0xff]
    %v431 = vld [vmem:[#allocation5 + $0xba8] sm:$0xff]
    %v432 = vld [vmem:[#allocation5 + $0xbb0] sm:$0xff]
    %v433 = vld [vmem:[#allocation5 + $0xbb8] sm:$0xff]
    %v434 = vld [vmem:[#allocation5 + $0xbc0] sm:$0xff]
    %v435 = vld [vmem:[#allocation5 + $0xbc8] sm:$0xff]
    %v436 = vld [vmem:[#allocation5 + $0xbd0] sm:$0xff]
    %v437 = vld [vmem:[#allocation5 + $0xbd8] sm:$0xff]
    %v438 = vld [vmem:[#allocation5 + $0xbe0] sm:$0xff]
    %v439 = vld [vmem:[#allocation5 + $0xbe8] sm:$0xff]
    %v440 = vld [vmem:[#allocation5 + $0xbf0] sm:$0xff]
    %v441 = vld [vmem:[#allocation5 + $0xbf8] sm:$0xff]
    %v442 = vld [vmem:[#allocation5 + $0xc00] sm:$0xff]
    %v443 = vld [vmem:[#allocation5 + $0xc08] sm:$0xff]
    %v444 = vld [vmem:[#allocation5 + $0xc10] sm:$0xff]
    %v445 = vld [vmem:[#allocation5 + $0xc18] sm:$0xff]
    %v446 = vld [vmem:[#allocation5 + $0xc20] sm:$0xff]
    %v447 = vld [vmem:[#allocation5 + $0xc28] sm:$0xff]
    %v448 = vld [vmem:[#allocation5 + $0xc30] sm:$0xff]
    %v449 = vld [vmem:[#allocation5 + $0xc38] sm:$0xff]
    %v450 = vld [vmem:[#allocation5 + $0xc40] sm:$0xff]
    %v451 = vld [vmem:[#allocation5 + $0xc48] sm:$0xff]
    %v452 = vld [vmem:[#allocation5 + $0xc50] sm:$0xff]
    %v453 = vld [vmem:[#allocation5 + $0xc58] sm:$0xff]
    %v454 = vld [vmem:[#allocation5 + $0xc60] sm:$0xff]
    %v455 = vld [vmem:[#allocation5 + $0xc68] sm:$0xff]
    %v456 = vld [vmem:[#allocation5 + $0xc70] sm:$0xff]
    %v457 = vld [vmem:[#allocation5 + $0xc78] sm:$0xff]
    %v458 = vld [vmem:[#allocation5 + $0xc80] sm:$0xff]
    %v459 = vld [vmem:[#allocation5 + $0xc88] sm:$0xff]
    %v460 = vld [vmem:[#allocation5 + $0xc90] sm:$0xff]
    %v461 = vld [vmem:[#allocation5 + $0xc98] sm:$0xff]
    %v462 = vld [vmem:[#allocation5 + $0xca0] sm:$0xff]
    %v463 = vld [vmem:[#allocation5 + $0xca8] sm:$0xff]
    %v464 = vld [vmem:[#allocation5 + $0xcb0] sm:$0xff]
    %v465 = vld [vmem:[#allocation5 + $0xcb8] sm:$0xff]
    %v466 = vld [vmem:[#allocation5 + $0xcc0] sm:$0xff]
    %v467 = vld [vmem:[#allocation5 + $0xcc8] sm:$0xff]
    %v468 = vld [vmem:[#allocation5 + $0xcd0] sm:$0xff]
    %v469 = vld [vmem:[#allocation5 + $0xcd8] sm:$0xff]
    %v470 = vld [vmem:[#allocation5 + $0xce0] sm:$0xff]
    %v471 = vld [vmem:[#allocation5 + $0xce8] sm:$0xff]
    %v472 = vld [vmem:[#allocation5 + $0xcf0] sm:$0xff]
    %v473 = vld [vmem:[#allocation5 + $0xcf8] sm:$0xff]
    %v474 = vld [vmem:[#allocation5 + $0xd00] sm:$0xff]
    %v475 = vld [vmem:[#allocation5 + $0xd08] sm:$0xff]
    %v476 = vld [vmem:[#allocation5 + $0xd10] sm:$0xff]
    %v477 = vld [vmem:[#allocation5 + $0xd18] sm:$0xff]
    %v478 = vld [vmem:[#allocation5 + $0xd20] sm:$0xff]
    %v479 = vld [vmem:[#allocation5 + $0xd28] sm:$0xff]
    %v480 = vld [vmem:[#allocation5 + $0xd30] sm:$0xff]
    %v481 = vld [vmem:[#allocation5 + $0xd38] sm:$0xff]
    %v482 = vld [vmem:[#allocation5 + $0xd40] sm:$0xff]
    %v483 = vld [vmem:[#allocation5 + $0xd48] sm:$0xff]
    %v484 = vld [vmem:[#allocation5 + $0xd50] sm:$0xff]
    %v485 = vld [vmem:[#allocation5 + $0xd58] sm:$0xff]
    %v486 = vld [vmem:[#allocation5 + $0xd60] sm:$0xff]
    %v487 = vld [vmem:[#allocation5 + $0xd68] sm:$0xff]
    %v488 = vld [vmem:[#allocation5 + $0xd70] sm:$0xff]
    %v489 = vld [vmem:[#allocation5 + $0xd78] sm:$0xff]
    %v490 = vld [vmem:[#allocation5 + $0xd80] sm:$0xff]
    %v491 = vld [vmem:[#allocation5 + $0xd88] sm:$0xff]
    %v492 = vld [vmem:[#allocation5 + $0xd90] sm:$0xff]
    %v493 = vld [vmem:[#allocation5 + $0xd98] sm:$0xff]
    %v494 = vld [vmem:[#allocation5 + $0xda0] sm:$0xff]
    %v495 = vld [vmem:[#allocation5 + $0xda8] sm:$0xff]
    %v496 = vld [vmem:[#allocation5 + $0xdb0] sm:$0xff]
    %v497 = vld [vmem:[#allocation5 + $0xdb8] sm:$0xff]
    %v498 = vld [vmem:[#allocation5 + $0xdc0] sm:$0xff]
    %v499 = vld [vmem:[#allocation5 + $0xdc8] sm:$0xff]
    %v500 = vld [vmem:[#allocation5 + $0xdd0] sm:$0xff]
    %v501 = vld [vmem:[#allocation5 + $0xdd8] sm:$0xff]
    %v502 = vld [vmem:[#allocation5 + $0xde0] sm:$0xff]
    %v503 = vld [vmem:[#allocation5 + $0xde8] sm:$0xff]
    %v504 = vld [vmem:[#allocation5 + $0xdf0] sm:$0xff]
    %v505 = vld [vmem:[#allocation5 + $0xdf8] sm:$0xff]
    %v506 = vld [vmem:[#allocation5 + $0xe00] sm:$0xff]
    %v507 = vld [vmem:[#allocation5 + $0xe08] sm:$0xff]
    %v508 = vld [vmem:[#allocation5 + $0xe10] sm:$0xff]
    %v509 = vld [vmem:[#allocation5 + $0xe18] sm:$0xff]
    %v510 = vld [vmem:[#allocation5 + $0xe20] sm:$0xff]
    %v511 = vld [vmem:[#allocation5 + $0xe28] sm:$0xff]
    %v512 = vld [vmem:[#allocation5 + $0xe30] sm:$0xff]
    %v513 = vld [vmem:[#allocation5 + $0xe38] sm:$0xff]
    %v514 = vld [vmem:[#allocation5 + $0xe40] sm:$0xff]
    %v515 = vld [vmem:[#allocation5 + $0xe48] sm:$0xff]
    %v516 = vld [vmem:[#allocation5 + $0xe50] sm:$0xff]
    %v517 = vld [vmem:[#allocation5 + $0xe58] sm:$0xff]
    %v518 = vld [vmem:[#allocation5 + $0xe60] sm:$0xff]
    %v519 = vld [vmem:[#allocation5 + $0xe68] sm:$0xff]
    %v520 = vld [vmem:[#allocation5 + $0xe70] sm:$0xff]
    %v521 = vld [vmem:[#allocation5 + $0xe78] sm:$0xff]
    %v522 = vld [vmem:[#allocation5 + $0xe80] sm:$0xff]
    %v523 = vld [vmem:[#allocation5 + $0xe88] sm:$0xff]
    %v524 = vld [vmem:[#allocation5 + $0xe90] sm:$0xff]
    %v525 = vld [vmem:[#allocation5 + $0xe98] sm:$0xff]
    %v526 = vld [vmem:[#allocation5 + $0xea0] sm:$0xff]
    %v527 = vld [vmem:[#allocation5 + $0xea8] sm:$0xff]
    %v528 = vld [vmem:[#allocation5 + $0xeb0] sm:$0xff]
    %v529 = vld [vmem:[#allocation5 + $0xeb8] sm:$0xff]
    %v530 = vld [vmem:[#allocation5 + $0xec0] sm:$0xff]
    %v531 = vld [vmem:[#allocation5 + $0xec8] sm:$0xff]
    %v532 = vld [vmem:[#allocation5 + $0xed0] sm:$0xff]
    %v533 = vld [vmem:[#allocation5 + $0xed8] sm:$0xff]
    %v534 = vld [vmem:[#allocation5 + $0xee0] sm:$0xff]
    %v535 = vld [vmem:[#allocation5 + $0xee8] sm:$0xff]
    %v536 = vld [vmem:[#allocation5 + $0xef0] sm:$0xff]
    %v537 = vld [vmem:[#allocation5 + $0xef8] sm:$0xff]
    %v1018 = vunpack.c.l.b16 %v58
    %v1019 = vunpack.c.h.b16 %v58
    %v1020 = vunpack.c.l.b16 %v59
    %v1021 = vunpack.c.h.b16 %v59
    %v1022 = vunpack.c.l.b16 %v60
    %v1023 = vunpack.c.h.b16 %v60
    %v1024 = vunpack.c.l.b16 %v61
    %v1025 = vunpack.c.h.b16 %v61
    %v1026 = vunpack.c.l.b16 %v62
    %v1027 = vunpack.c.h.b16 %v62
    %v1028 = vunpack.c.l.b16 %v63
    %v1029 = vunpack.c.h.b16 %v63
    %v1030 = vunpack.c.l.b16 %v64
    %v1031 = vunpack.c.h.b16 %v64
    %v1032 = vunpack.c.l.b16 %v65
    %v1033 = vunpack.c.h.b16 %v65
    %v1034 = vunpack.c.l.b16 %v66
    %v1035 = vunpack.c.h.b16 %v66
    %v1036 = vunpack.c.l.b16 %v67
    %v1037 = vunpack.c.h.b16 %v67
    %v1038 = vunpack.c.l.b16 %v68
    %v1039 = vunpack.c.h.b16 %v68
    %v1040 = vunpack.c.l.b16 %v69
    %v1041 = vunpack.c.h.b16 %v69
    %v1042 = vunpack.c.l.b16 %v70
    %v1043 = vunpack.c.h.b16 %v70
    %v1044 = vunpack.c.l.b16 %v71
    %v1045 = vunpack.c.h.b16 %v71
    %v1046 = vunpack.c.l.b16 %v72
    %v1047 = vunpack.c.h.b16 %v72
    %v1048 = vunpack.c.l.b16 %v73
    %v1049 = vunpack.c.h.b16 %v73
    %v1050 = vunpack.c.l.b16 %v74
    %v1051 = vunpack.c.h.b16 %v74
    %v1052 = vunpack.c.l.b16 %v75
    %v1053 = vunpack.c.h.b16 %v75
    %v1054 = vunpack.c.l.b16 %v76
    %v1055 = vunpack.c.h.b16 %v76
    %v1056 = vunpack.c.l.b16 %v77
    %v1057 = vunpack.c.h.b16 %v77
    %v1058 = vunpack.c.l.b16 %v78
    %v1059 = vunpack.c.h.b16 %v78
    %v1060 = vunpack.c.l.b16 %v79
    %v1061 = vunpack.c.h.b16 %v79
    %v1062 = vunpack.c.l.b16 %v80
    %v1063 = vunpack.c.h.b16 %v80
    %v1064 = vunpack.c.l.b16 %v81
    %v1065 = vunpack.c.h.b16 %v81
    %v1066 = vunpack.c.l.b16 %v82
    %v1067 = vunpack.c.h.b16 %v82
    %v1068 = vunpack.c.l.b16 %v83
    %v1069 = vunpack.c.h.b16 %v83
    %v1070 = vunpack.c.l.b16 %v84
    %v1071 = vunpack.c.h.b16 %v84
    %v1072 = vunpack.c.l.b16 %v85
    %v1073 = vunpack.c.h.b16 %v85
    %v1074 = vunpack.c.l.b16 %v86
    %v1075 = vunpack.c.h.b16 %v86
    %v1076 = vunpack.c.l.b16 %v87
    %v1077 = vunpack.c.h.b16 %v87
    %v1078 = vunpack.c.l.b16 %v88
    %v1079 = vunpack.c.h.b16 %v88
    %v1080 = vunpack.c.l.b16 %v89
    %v1081 = vunpack.c.h.b16 %v89
    %v1082 = vunpack.c.l.b16 %v90
    %v1083 = vunpack.c.h.b16 %v90
    %v1084 = vunpack.c.l.b16 %v91
    %v1085 = vunpack.c.h.b16 %v91
    %v1086 = vunpack.c.l.b16 %v92
    %v1087 = vunpack.c.h.b16 %v92
    %v1088 = vunpack.c.l.b16 %v93
    %v1089 = vunpack.c.h.b16 %v93
    %v1090 = vunpack.c.l.b16 %v94
    %v1091 = vunpack.c.h.b16 %v94
    %v1092 = vunpack.c.l.b16 %v95
    %v1093 = vunpack.c.h.b16 %v95
    %v1094 = vunpack.c.l.b16 %v96
    %v1095 = vunpack.c.h.b16 %v96
    %v1096 = vunpack.c.l.b16 %v97
    %v1097 = vunpack.c.h.b16 %v97
    %v1098 = vunpack.c.l.b16 %v98
    %v1099 = vunpack.c.h.b16 %v98
    %v1100 = vunpack.c.l.b16 %v99
    %v1101 = vunpack.c.h.b16 %v99
    %v1102 = vunpack.c.l.b16 %v100
    %v1103 = vunpack.c.h.b16 %v100
    %v1104 = vunpack.c.l.b16 %v101
    %v1105 = vunpack.c.h.b16 %v101
    %v1106 = vunpack.c.l.b16 %v102
    %v1107 = vunpack.c.h.b16 %v102
    %v1108 = vunpack.c.l.b16 %v103
    %v1109 = vunpack.c.h.b16 %v103
    %v1110 = vunpack.c.l.b16 %v104
    %v1111 = vunpack.c.h.b16 %v104
    %v1112 = vunpack.c.l.b16 %v105
    %v1113 = vunpack.c.h.b16 %v105
    %v1114 = vunpack.c.l.b16 %v106
    %v1115 = vunpack.c.h.b16 %v106
    %v1116 = vunpack.c.l.b16 %v107
    %v1117 = vunpack.c.h.b16 %v107
    %v1118 = vunpack.c.l.b16 %v108
    %v1119 = vunpack.c.h.b16 %v108
    %v1120 = vunpack.c.l.b16 %v109
    %v1121 = vunpack.c.h.b16 %v109
    %v1122 = vunpack.c.l.b16 %v110
    %v1123 = vunpack.c.h.b16 %v110
    %v1124 = vunpack.c.l.b16 %v111
    %v1125 = vunpack.c.h.b16 %v111
    %v1126 = vunpack.c.l.b16 %v112
    %v1127 = vunpack.c.h.b16 %v112
    %v1128 = vunpack.c.l.b16 %v113
    %v1129 = vunpack.c.h.b16 %v113
    %v1130 = vunpack.c.l.b16 %v114
    %v1131 = vunpack.c.h.b16 %v114
    %v1132 = vunpack.c.l.b16 %v115
    %v1133 = vunpack.c.h.b16 %v115
    %v1134 = vunpack.c.l.b16 %v116
    %v1135 = vunpack.c.h.b16 %v116
    %v1136 = vunpack.c.l.b16 %v117
    %v1137 = vunpack.c.h.b16 %v117
    %v1138 = vunpack.c.l.b16 %v118
    %v1139 = vunpack.c.h.b16 %v118
    %v1140 = vunpack.c.l.b16 %v119
    %v1141 = vunpack.c.h.b16 %v119
    %v1142 = vunpack.c.l.b16 %v120
    %v1143 = vunpack.c.h.b16 %v120
    %v1144 = vunpack.c.l.b16 %v121
    %v1145 = vunpack.c.h.b16 %v121
    %v1146 = vunpack.c.l.b16 %v122
    %v1147 = vunpack.c.h.b16 %v122
    %v1148 = vunpack.c.l.b16 %v123
    %v1149 = vunpack.c.h.b16 %v123
    %v1150 = vunpack.c.l.b16 %v124
    %v1151 = vunpack.c.h.b16 %v124
    %v1152 = vunpack.c.l.b16 %v125
    %v1153 = vunpack.c.h.b16 %v125
    %v1154 = vunpack.c.l.b16 %v126
    %v1155 = vunpack.c.h.b16 %v126
    %v1156 = vunpack.c.l.b16 %v127
    %v1157 = vunpack.c.h.b16 %v127
    %v1158 = vunpack.c.l.b16 %v128
    %v1159 = vunpack.c.h.b16 %v128
    %v1160 = vunpack.c.l.b16 %v129
    %v1161 = vunpack.c.h.b16 %v129
    %v1162 = vunpack.c.l.b16 %v130
    %v1163 = vunpack.c.h.b16 %v130
    %v1164 = vunpack.c.l.b16 %v131
    %v1165 = vunpack.c.h.b16 %v131
    %v1166 = vunpack.c.l.b16 %v132
    %v1167 = vunpack.c.h.b16 %v132
    %v1168 = vunpack.c.l.b16 %v133
    %v1169 = vunpack.c.h.b16 %v133
    %v1170 = vunpack.c.l.b16 %v134
    %v1171 = vunpack.c.h.b16 %v134
    %v1172 = vunpack.c.l.b16 %v135
    %v1173 = vunpack.c.h.b16 %v135
    %v1174 = vunpack.c.l.b16 %v136
    %v1175 = vunpack.c.h.b16 %v136
    %v1176 = vunpack.c.l.b16 %v137
    %v1177 = vunpack.c.h.b16 %v137
    %v1178 = vunpack.c.l.b16 %v138
    %v1179 = vunpack.c.h.b16 %v138
    %v1180 = vunpack.c.l.b16 %v139
    %v1181 = vunpack.c.h.b16 %v139
    %v1182 = vunpack.c.l.b16 %v140
    %v1183 = vunpack.c.h.b16 %v140
    %v1184 = vunpack.c.l.b16 %v141
    %v1185 = vunpack.c.h.b16 %v141
    %v1186 = vunpack.c.l.b16 %v142
    %v1187 = vunpack.c.h.b16 %v142
    %v1188 = vunpack.c.l.b16 %v143
    %v1189 = vunpack.c.h.b16 %v143
    %v1190 = vunpack.c.l.b16 %v144
    %v1191 = vunpack.c.h.b16 %v144
    %v1192 = vunpack.c.l.b16 %v145
    %v1193 = vunpack.c.h.b16 %v145
    %v1194 = vunpack.c.l.b16 %v146
    %v1195 = vunpack.c.h.b16 %v146
    %v1196 = vunpack.c.l.b16 %v147
    %v1197 = vunpack.c.h.b16 %v147
    %v1198 = vunpack.c.l.b16 %v148
    %v1199 = vunpack.c.h.b16 %v148
    %v1200 = vunpack.c.l.b16 %v149
    %v1201 = vunpack.c.h.b16 %v149
    %v1202 = vunpack.c.l.b16 %v150
    %v1203 = vunpack.c.h.b16 %v150
    %v1204 = vunpack.c.l.b16 %v151
    %v1205 = vunpack.c.h.b16 %v151
    %v1206 = vunpack.c.l.b16 %v152
    %v1207 = vunpack.c.h.b16 %v152
    %v1208 = vunpack.c.l.b16 %v153
    %v1209 = vunpack.c.h.b16 %v153
    %v1210 = vunpack.c.l.b16 %v154
    %v1211 = vunpack.c.h.b16 %v154
    %v1212 = vunpack.c.l.b16 %v155
    %v1213 = vunpack.c.h.b16 %v155
    %v1214 = vunpack.c.l.b16 %v156
    %v1215 = vunpack.c.h.b16 %v156
    %v1216 = vunpack.c.l.b16 %v157
    %v1217 = vunpack.c.h.b16 %v157
    %v1218 = vunpack.c.l.b16 %v158
    %v1219 = vunpack.c.h.b16 %v158
    %v1220 = vunpack.c.l.b16 %v159
    %v1221 = vunpack.c.h.b16 %v159
    %v1222 = vunpack.c.l.b16 %v160
    %v1223 = vunpack.c.h.b16 %v160
    %v1224 = vunpack.c.l.b16 %v161
    %v1225 = vunpack.c.h.b16 %v161
    %v1226 = vunpack.c.l.b16 %v162
    %v1227 = vunpack.c.h.b16 %v162
    %v1228 = vunpack.c.l.b16 %v163
    %v1229 = vunpack.c.h.b16 %v163
    %v1230 = vunpack.c.l.b16 %v164
    %v1231 = vunpack.c.h.b16 %v164
    %v1232 = vunpack.c.l.b16 %v165
    %v1233 = vunpack.c.h.b16 %v165
    %v1234 = vunpack.c.l.b16 %v166
    %v1235 = vunpack.c.h.b16 %v166
    %v1236 = vunpack.c.l.b16 %v167
    %v1237 = vunpack.c.h.b16 %v167
    %v1238 = vunpack.c.l.b16 %v168
    %v1239 = vunpack.c.h.b16 %v168
    %v1240 = vunpack.c.l.b16 %v169
    %v1241 = vunpack.c.h.b16 %v169
    %v1242 = vunpack.c.l.b16 %v170
    %v1243 = vunpack.c.h.b16 %v170
    %v1244 = vunpack.c.l.b16 %v171
    %v1245 = vunpack.c.h.b16 %v171
    %v1246 = vunpack.c.l.b16 %v172
    %v1247 = vunpack.c.h.b16 %v172
    %v1248 = vunpack.c.l.b16 %v173
    %v1249 = vunpack.c.h.b16 %v173
    %v1250 = vunpack.c.l.b16 %v174
    %v1251 = vunpack.c.h.b16 %v174
    %v1252 = vunpack.c.l.b16 %v175
    %v1253 = vunpack.c.h.b16 %v175
    %v1254 = vunpack.c.l.b16 %v176
    %v1255 = vunpack.c.h.b16 %v176
    %v1256 = vunpack.c.l.b16 %v177
    %v1257 = vunpack.c.h.b16 %v177
    %v1258 = vunpack.c.l.b16 %v178
    %v1259 = vunpack.c.h.b16 %v178
    %v1260 = vunpack.c.l.b16 %v179
    %v1261 = vunpack.c.h.b16 %v179
    %v1262 = vunpack.c.l.b16 %v180
    %v1263 = vunpack.c.h.b16 %v180
    %v1264 = vunpack.c.l.b16 %v181
    %v1265 = vunpack.c.h.b16 %v181
    %v1266 = vunpack.c.l.b16 %v182
    %v1267 = vunpack.c.h.b16 %v182
    %v1268 = vunpack.c.l.b16 %v183
    %v1269 = vunpack.c.h.b16 %v183
    %v1270 = vunpack.c.l.b16 %v184
    %v1271 = vunpack.c.h.b16 %v184
    %v1272 = vunpack.c.l.b16 %v185
    %v1273 = vunpack.c.h.b16 %v185
    %v1274 = vunpack.c.l.b16 %v186
    %v1275 = vunpack.c.h.b16 %v186
    %v1276 = vunpack.c.l.b16 %v187
    %v1277 = vunpack.c.h.b16 %v187
    %v1278 = vunpack.c.l.b16 %v188
    %v1279 = vunpack.c.h.b16 %v188
    %v1280 = vunpack.c.l.b16 %v189
    %v1281 = vunpack.c.h.b16 %v189
    %v1282 = vunpack.c.l.b16 %v190
    %v1283 = vunpack.c.h.b16 %v190
    %v1284 = vunpack.c.l.b16 %v191
    %v1285 = vunpack.c.h.b16 %v191
    %v1286 = vunpack.c.l.b16 %v192
    %v1287 = vunpack.c.h.b16 %v192
    %v1288 = vunpack.c.l.b16 %v193
    %v1289 = vunpack.c.h.b16 %v193
    %v1290 = vunpack.c.l.b16 %v194
    %v1291 = vunpack.c.h.b16 %v194
    %v1292 = vunpack.c.l.b16 %v195
    %v1293 = vunpack.c.h.b16 %v195
    %v1294 = vunpack.c.l.b16 %v196
    %v1295 = vunpack.c.h.b16 %v196
    %v1296 = vunpack.c.l.b16 %v197
    %v1297 = vunpack.c.h.b16 %v197
    %v1298 = vunpack.c.l.b16 %v198
    %v1299 = vunpack.c.h.b16 %v198
    %v1300 = vunpack.c.l.b16 %v199
    %v1301 = vunpack.c.h.b16 %v199
    %v1302 = vunpack.c.l.b16 %v200
    %v1303 = vunpack.c.h.b16 %v200
    %v1304 = vunpack.c.l.b16 %v201
    %v1305 = vunpack.c.h.b16 %v201
    %v1306 = vunpack.c.l.b16 %v202
    %v1307 = vunpack.c.h.b16 %v202
    %v1308 = vunpack.c.l.b16 %v203
    %v1309 = vunpack.c.h.b16 %v203
    %v1310 = vunpack.c.l.b16 %v204
    %v1311 = vunpack.c.h.b16 %v204
    %v1312 = vunpack.c.l.b16 %v205
    %v1313 = vunpack.c.h.b16 %v205
    %v1314 = vunpack.c.l.b16 %v206
    %v1315 = vunpack.c.h.b16 %v206
    %v1316 = vunpack.c.l.b16 %v207
    %v1317 = vunpack.c.h.b16 %v207
    %v1318 = vunpack.c.l.b16 %v208
    %v1319 = vunpack.c.h.b16 %v208
    %v1320 = vunpack.c.l.b16 %v209
    %v1321 = vunpack.c.h.b16 %v209
    %v1322 = vunpack.c.l.b16 %v210
    %v1323 = vunpack.c.h.b16 %v210
    %v1324 = vunpack.c.l.b16 %v211
    %v1325 = vunpack.c.h.b16 %v211
    %v1326 = vunpack.c.l.b16 %v212
    %v1327 = vunpack.c.h.b16 %v212
    %v1328 = vunpack.c.l.b16 %v213
    %v1329 = vunpack.c.h.b16 %v213
    %v1330 = vunpack.c.l.b16 %v214
    %v1331 = vunpack.c.h.b16 %v214
    %v1332 = vunpack.c.l.b16 %v215
    %v1333 = vunpack.c.h.b16 %v215
    %v1334 = vunpack.c.l.b16 %v216
    %v1335 = vunpack.c.h.b16 %v216
    %v1336 = vunpack.c.l.b16 %v217
    %v1337 = vunpack.c.h.b16 %v217
    %v1338 = vunpack.c.l.b16 %v218
    %v1339 = vunpack.c.h.b16 %v218
    %v1340 = vunpack.c.l.b16 %v219
    %v1341 = vunpack.c.h.b16 %v219
    %v1342 = vunpack.c.l.b16 %v220
    %v1343 = vunpack.c.h.b16 %v220
    %v1344 = vunpack.c.l.b16 %v221
    %v1345 = vunpack.c.h.b16 %v221
    %v1346 = vunpack.c.l.b16 %v222
    %v1347 = vunpack.c.h.b16 %v222
    %v1348 = vunpack.c.l.b16 %v223
    %v1349 = vunpack.c.h.b16 %v223
    %v1350 = vunpack.c.l.b16 %v224
    %v1351 = vunpack.c.h.b16 %v224
    %v1352 = vunpack.c.l.b16 %v225
    %v1353 = vunpack.c.h.b16 %v225
    %v1354 = vunpack.c.l.b16 %v226
    %v1355 = vunpack.c.h.b16 %v226
    %v1356 = vunpack.c.l.b16 %v227
    %v1357 = vunpack.c.h.b16 %v227
    %v1358 = vunpack.c.l.b16 %v228
    %v1359 = vunpack.c.h.b16 %v228
    %v1360 = vunpack.c.l.b16 %v229
    %v1361 = vunpack.c.h.b16 %v229
    %v1362 = vunpack.c.l.b16 %v230
    %v1363 = vunpack.c.h.b16 %v230
    %v1364 = vunpack.c.l.b16 %v231
    %v1365 = vunpack.c.h.b16 %v231
    %v1366 = vunpack.c.l.b16 %v232
    %v1367 = vunpack.c.h.b16 %v232
    %v1368 = vunpack.c.l.b16 %v233
    %v1369 = vunpack.c.h.b16 %v233
    %v1370 = vunpack.c.l.b16 %v234
    %v1371 = vunpack.c.h.b16 %v234
    %v1372 = vunpack.c.l.b16 %v235
    %v1373 = vunpack.c.h.b16 %v235
    %v1374 = vunpack.c.l.b16 %v236
    %v1375 = vunpack.c.h.b16 %v236
    %v1376 = vunpack.c.l.b16 %v237
    %v1377 = vunpack.c.h.b16 %v237
    %v1378 = vunpack.c.l.b16 %v238
    %v1379 = vunpack.c.h.b16 %v238
    %v1380 = vunpack.c.l.b16 %v239
    %v1381 = vunpack.c.h.b16 %v239
    %v1382 = vunpack.c.l.b16 %v240
    %v1383 = vunpack.c.h.b16 %v240
    %v1384 = vunpack.c.l.b16 %v241
    %v1385 = vunpack.c.h.b16 %v241
    %v1386 = vunpack.c.l.b16 %v242
    %v1387 = vunpack.c.h.b16 %v242
    %v1388 = vunpack.c.l.b16 %v243
    %v1389 = vunpack.c.h.b16 %v243
    %v1390 = vunpack.c.l.b16 %v244
    %v1391 = vunpack.c.h.b16 %v244
    %v1392 = vunpack.c.l.b16 %v245
    %v1393 = vunpack.c.h.b16 %v245
    %v1394 = vunpack.c.l.b16 %v246
    %v1395 = vunpack.c.h.b16 %v246
    %v1396 = vunpack.c.l.b16 %v247
    %v1397 = vunpack.c.h.b16 %v247
    %v1398 = vunpack.c.l.b16 %v248
    %v1399 = vunpack.c.h.b16 %v248
    %v1400 = vunpack.c.l.b16 %v249
    %v1401 = vunpack.c.h.b16 %v249
    %v1402 = vunpack.c.l.b16 %v250
    %v1403 = vunpack.c.h.b16 %v250
    %v1404 = vunpack.c.l.b16 %v251
    %v1405 = vunpack.c.h.b16 %v251
    %v1406 = vunpack.c.l.b16 %v252
    %v1407 = vunpack.c.h.b16 %v252
    %v1408 = vunpack.c.l.b16 %v253
    %v1409 = vunpack.c.h.b16 %v253
    %v1410 = vunpack.c.l.b16 %v254
    %v1411 = vunpack.c.h.b16 %v254
    %v1412 = vunpack.c.l.b16 %v255
    %v1413 = vunpack.c.h.b16 %v255
    %v1414 = vunpack.c.l.b16 %v256
    %v1415 = vunpack.c.h.b16 %v256
    %v1416 = vunpack.c.l.b16 %v257
    %v1417 = vunpack.c.h.b16 %v257
    %v1418 = vunpack.c.l.b16 %v258
    %v1419 = vunpack.c.h.b16 %v258
    %v1420 = vunpack.c.l.b16 %v259
    %v1421 = vunpack.c.h.b16 %v259
    %v1422 = vunpack.c.l.b16 %v260
    %v1423 = vunpack.c.h.b16 %v260
    %v1424 = vunpack.c.l.b16 %v261
    %v1425 = vunpack.c.h.b16 %v261
    %v1426 = vunpack.c.l.b16 %v262
    %v1427 = vunpack.c.h.b16 %v262
    %v1428 = vunpack.c.l.b16 %v263
    %v1429 = vunpack.c.h.b16 %v263
    %v1430 = vunpack.c.l.b16 %v264
    %v1431 = vunpack.c.h.b16 %v264
    %v1432 = vunpack.c.l.b16 %v265
    %v1433 = vunpack.c.h.b16 %v265
    %v1434 = vunpack.c.l.b16 %v266
    %v1435 = vunpack.c.h.b16 %v266
    %v1436 = vunpack.c.l.b16 %v267
    %v1437 = vunpack.c.h.b16 %v267
    %v1438 = vunpack.c.l.b16 %v268
    %v1439 = vunpack.c.h.b16 %v268
    %v1440 = vunpack.c.l.b16 %v269
    %v1441 = vunpack.c.h.b16 %v269
    %v1442 = vunpack.c.l.b16 %v270
    %v1443 = vunpack.c.h.b16 %v270
    %v1444 = vunpack.c.l.b16 %v271
    %v1445 = vunpack.c.h.b16 %v271
    %v1446 = vunpack.c.l.b16 %v272
    %v1447 = vunpack.c.h.b16 %v272
    %v1448 = vunpack.c.l.b16 %v273
    %v1449 = vunpack.c.h.b16 %v273
    %v1450 = vunpack.c.l.b16 %v274
    %v1451 = vunpack.c.h.b16 %v274
    %v1452 = vunpack.c.l.b16 %v275
    %v1453 = vunpack.c.h.b16 %v275
    %v1454 = vunpack.c.l.b16 %v276
    %v1455 = vunpack.c.h.b16 %v276
    %v1456 = vunpack.c.l.b16 %v277
    %v1457 = vunpack.c.h.b16 %v277
    %v1458 = vunpack.c.l.b16 %v278
    %v1459 = vunpack.c.h.b16 %v278
    %v1460 = vunpack.c.l.b16 %v279
    %v1461 = vunpack.c.h.b16 %v279
    %v1462 = vunpack.c.l.b16 %v280
    %v1463 = vunpack.c.h.b16 %v280
    %v1464 = vunpack.c.l.b16 %v281
    %v1465 = vunpack.c.h.b16 %v281
    %v1466 = vunpack.c.l.b16 %v282
    %v1467 = vunpack.c.h.b16 %v282
    %v1468 = vunpack.c.l.b16 %v283
    %v1469 = vunpack.c.h.b16 %v283
    %v1470 = vunpack.c.l.b16 %v284
    %v1471 = vunpack.c.h.b16 %v284
    %v1472 = vunpack.c.l.b16 %v285
    %v1473 = vunpack.c.h.b16 %v285
    %v1474 = vunpack.c.l.b16 %v286
    %v1475 = vunpack.c.h.b16 %v286
    %v1476 = vunpack.c.l.b16 %v287
    %v1477 = vunpack.c.h.b16 %v287
    %v1478 = vunpack.c.l.b16 %v288
    %v1479 = vunpack.c.h.b16 %v288
    %v1480 = vunpack.c.l.b16 %v289
    %v1481 = vunpack.c.h.b16 %v289
    %v1482 = vunpack.c.l.b16 %v290
    %v1483 = vunpack.c.h.b16 %v290
    %v1484 = vunpack.c.l.b16 %v291
    %v1485 = vunpack.c.h.b16 %v291
    %v1486 = vunpack.c.l.b16 %v292
    %v1487 = vunpack.c.h.b16 %v292
    %v1488 = vunpack.c.l.b16 %v293
    %v1489 = vunpack.c.h.b16 %v293
    %v1490 = vunpack.c.l.b16 %v294
    %v1491 = vunpack.c.h.b16 %v294
    %v1492 = vunpack.c.l.b16 %v295
    %v1493 = vunpack.c.h.b16 %v295
    %v1494 = vunpack.c.l.b16 %v296
    %v1495 = vunpack.c.h.b16 %v296
    %v1496 = vunpack.c.l.b16 %v297
    %v1497 = vunpack.c.h.b16 %v297
    %v1498 = vunpack.c.l.b16 %v298
    %v1499 = vunpack.c.h.b16 %v298
    %v1500 = vunpack.c.l.b16 %v299
    %v1501 = vunpack.c.h.b16 %v299
    %v1502 = vunpack.c.l.b16 %v300
    %v1503 = vunpack.c.h.b16 %v300
    %v1504 = vunpack.c.l.b16 %v301
    %v1505 = vunpack.c.h.b16 %v301
    %v1506 = vunpack.c.l.b16 %v302
    %v1507 = vunpack.c.h.b16 %v302
    %v1508 = vunpack.c.l.b16 %v303
    %v1509 = vunpack.c.h.b16 %v303
    %v1510 = vunpack.c.l.b16 %v304
    %v1511 = vunpack.c.h.b16 %v304
    %v1512 = vunpack.c.l.b16 %v305
    %v1513 = vunpack.c.h.b16 %v305
    %v1514 = vunpack.c.l.b16 %v306
    %v1515 = vunpack.c.h.b16 %v306
    %v1516 = vunpack.c.l.b16 %v307
    %v1517 = vunpack.c.h.b16 %v307
    %v1518 = vunpack.c.l.b16 %v308
    %v1519 = vunpack.c.h.b16 %v308
    %v1520 = vunpack.c.l.b16 %v309
    %v1521 = vunpack.c.h.b16 %v309
    %v1522 = vunpack.c.l.b16 %v310
    %v1523 = vunpack.c.h.b16 %v310
    %v1524 = vunpack.c.l.b16 %v311
    %v1525 = vunpack.c.h.b16 %v311
    %v1526 = vunpack.c.l.b16 %v312
    %v1527 = vunpack.c.h.b16 %v312
    %v1528 = vunpack.c.l.b16 %v313
    %v1529 = vunpack.c.h.b16 %v313
    %v1530 = vunpack.c.l.b16 %v314
    %v1531 = vunpack.c.h.b16 %v314
    %v1532 = vunpack.c.l.b16 %v315
    %v1533 = vunpack.c.h.b16 %v315
    %v1534 = vunpack.c.l.b16 %v316
    %v1535 = vunpack.c.h.b16 %v316
    %v1536 = vunpack.c.l.b16 %v317
    %v1537 = vunpack.c.h.b16 %v317
    %v1538 = vunpack.c.l.b16 %v318
    %v1539 = vunpack.c.h.b16 %v318
    %v1540 = vunpack.c.l.b16 %v319
    %v1541 = vunpack.c.h.b16 %v319
    %v1542 = vunpack.c.l.b16 %v320
    %v1543 = vunpack.c.h.b16 %v320
    %v1544 = vunpack.c.l.b16 %v321
    %v1545 = vunpack.c.h.b16 %v321
    %v1546 = vunpack.c.l.b16 %v322
    %v1547 = vunpack.c.h.b16 %v322
    %v1548 = vunpack.c.l.b16 %v323
    %v1549 = vunpack.c.h.b16 %v323
    %v1550 = vunpack.c.l.b16 %v324
    %v1551 = vunpack.c.h.b16 %v324
    %v1552 = vunpack.c.l.b16 %v325
    %v1553 = vunpack.c.h.b16 %v325
    %v1554 = vunpack.c.l.b16 %v326
    %v1555 = vunpack.c.h.b16 %v326
    %v1556 = vunpack.c.l.b16 %v327
    %v1557 = vunpack.c.h.b16 %v327
    %v1558 = vunpack.c.l.b16 %v328
    %v1559 = vunpack.c.h.b16 %v328
    %v1560 = vunpack.c.l.b16 %v329
    %v1561 = vunpack.c.h.b16 %v329
    %v1562 = vunpack.c.l.b16 %v330
    %v1563 = vunpack.c.h.b16 %v330
    %v1564 = vunpack.c.l.b16 %v331
    %v1565 = vunpack.c.h.b16 %v331
    %v1566 = vunpack.c.l.b16 %v332
    %v1567 = vunpack.c.h.b16 %v332
    %v1568 = vunpack.c.l.b16 %v333
    %v1569 = vunpack.c.h.b16 %v333
    %v1570 = vunpack.c.l.b16 %v334
    %v1571 = vunpack.c.h.b16 %v334
    %v1572 = vunpack.c.l.b16 %v335
    %v1573 = vunpack.c.h.b16 %v335
    %v1574 = vunpack.c.l.b16 %v336
    %v1575 = vunpack.c.h.b16 %v336
    %v1576 = vunpack.c.l.b16 %v337
    %v1577 = vunpack.c.h.b16 %v337
    %v1578 = vunpack.c.l.b16 %v338
    %v1579 = vunpack.c.h.b16 %v338
    %v1580 = vunpack.c.l.b16 %v339
    %v1581 = vunpack.c.h.b16 %v339
    %v1582 = vunpack.c.l.b16 %v340
    %v1583 = vunpack.c.h.b16 %v340
    %v1584 = vunpack.c.l.b16 %v341
    %v1585 = vunpack.c.h.b16 %v341
    %v1586 = vunpack.c.l.b16 %v342
    %v1587 = vunpack.c.h.b16 %v342
    %v1588 = vunpack.c.l.b16 %v343
    %v1589 = vunpack.c.h.b16 %v343
    %v1590 = vunpack.c.l.b16 %v344
    %v1591 = vunpack.c.h.b16 %v344
    %v1592 = vunpack.c.l.b16 %v345
    %v1593 = vunpack.c.h.b16 %v345
    %v1594 = vunpack.c.l.b16 %v346
    %v1595 = vunpack.c.h.b16 %v346
    %v1596 = vunpack.c.l.b16 %v347
    %v1597 = vunpack.c.h.b16 %v347
    %v1598 = vunpack.c.l.b16 %v348
    %v1599 = vunpack.c.h.b16 %v348
    %v1600 = vunpack.c.l.b16 %v349
    %v1601 = vunpack.c.h.b16 %v349
    %v1602 = vunpack.c.l.b16 %v350
    %v1603 = vunpack.c.h.b16 %v350
    %v1604 = vunpack.c.l.b16 %v351
    %v1605 = vunpack.c.h.b16 %v351
    %v1606 = vunpack.c.l.b16 %v352
    %v1607 = vunpack.c.h.b16 %v352
    %v1608 = vunpack.c.l.b16 %v353
    %v1609 = vunpack.c.h.b16 %v353
    %v1610 = vunpack.c.l.b16 %v354
    %v1611 = vunpack.c.h.b16 %v354
    %v1612 = vunpack.c.l.b16 %v355
    %v1613 = vunpack.c.h.b16 %v355
    %v1614 = vunpack.c.l.b16 %v356
    %v1615 = vunpack.c.h.b16 %v356
    %v1616 = vunpack.c.l.b16 %v357
    %v1617 = vunpack.c.h.b16 %v357
    %v1618 = vunpack.c.l.b16 %v358
    %v1619 = vunpack.c.h.b16 %v358
    %v1620 = vunpack.c.l.b16 %v359
    %v1621 = vunpack.c.h.b16 %v359
    %v1622 = vunpack.c.l.b16 %v360
    %v1623 = vunpack.c.h.b16 %v360
    %v1624 = vunpack.c.l.b16 %v361
    %v1625 = vunpack.c.h.b16 %v361
    %v1626 = vunpack.c.l.b16 %v362
    %v1627 = vunpack.c.h.b16 %v362
    %v1628 = vunpack.c.l.b16 %v363
    %v1629 = vunpack.c.h.b16 %v363
    %v1630 = vunpack.c.l.b16 %v364
    %v1631 = vunpack.c.h.b16 %v364
    %v1632 = vunpack.c.l.b16 %v365
    %v1633 = vunpack.c.h.b16 %v365
    %v1634 = vunpack.c.l.b16 %v366
    %v1635 = vunpack.c.h.b16 %v366
    %v1636 = vunpack.c.l.b16 %v367
    %v1637 = vunpack.c.h.b16 %v367
    %v1638 = vunpack.c.l.b16 %v368
    %v1639 = vunpack.c.h.b16 %v368
    %v1640 = vunpack.c.l.b16 %v369
    %v1641 = vunpack.c.h.b16 %v369
    %v1642 = vunpack.c.l.b16 %v370
    %v1643 = vunpack.c.h.b16 %v370
    %v1644 = vunpack.c.l.b16 %v371
    %v1645 = vunpack.c.h.b16 %v371
    %v1646 = vunpack.c.l.b16 %v372
    %v1647 = vunpack.c.h.b16 %v372
    %v1648 = vunpack.c.l.b16 %v373
    %v1649 = vunpack.c.h.b16 %v373
    %v1650 = vunpack.c.l.b16 %v374
    %v1651 = vunpack.c.h.b16 %v374
    %v1652 = vunpack.c.l.b16 %v375
    %v1653 = vunpack.c.h.b16 %v375
    %v1654 = vunpack.c.l.b16 %v376
    %v1655 = vunpack.c.h.b16 %v376
    %v1656 = vunpack.c.l.b16 %v377
    %v1657 = vunpack.c.h.b16 %v377
    %v1658 = vunpack.c.l.b16 %v378
    %v1659 = vunpack.c.h.b16 %v378
    %v1660 = vunpack.c.l.b16 %v379
    %v1661 = vunpack.c.h.b16 %v379
    %v1662 = vunpack.c.l.b16 %v380
    %v1663 = vunpack.c.h.b16 %v380
    %v1664 = vunpack.c.l.b16 %v381
    %v1665 = vunpack.c.h.b16 %v381
    %v1666 = vunpack.c.l.b16 %v382
    %v1667 = vunpack.c.h.b16 %v382
    %v1668 = vunpack.c.l.b16 %v383
    %v1669 = vunpack.c.h.b16 %v383
    %v1670 = vunpack.c.l.b16 %v384
    %v1671 = vunpack.c.h.b16 %v384
    %v1672 = vunpack.c.l.b16 %v385
    %v1673 = vunpack.c.h.b16 %v385
    %v1674 = vunpack.c.l.b16 %v386
    %v1675 = vunpack.c.h.b16 %v386
    %v1676 = vunpack.c.l.b16 %v387
    %v1677 = vunpack.c.h.b16 %v387
    %v1678 = vunpack.c.l.b16 %v388
    %v1679 = vunpack.c.h.b16 %v388
    %v1680 = vunpack.c.l.b16 %v389
    %v1681 = vunpack.c.h.b16 %v389
    %v1682 = vunpack.c.l.b16 %v390
    %v1683 = vunpack.c.h.b16 %v390
    %v1684 = vunpack.c.l.b16 %v391
    %v1685 = vunpack.c.h.b16 %v391
    %v1686 = vunpack.c.l.b16 %v392
    %v1687 = vunpack.c.h.b16 %v392
    %v1688 = vunpack.c.l.b16 %v393
    %v1689 = vunpack.c.h.b16 %v393
    %v1690 = vunpack.c.l.b16 %v394
    %v1691 = vunpack.c.h.b16 %v394
    %v1692 = vunpack.c.l.b16 %v395
    %v1693 = vunpack.c.h.b16 %v395
    %v1694 = vunpack.c.l.b16 %v396
    %v1695 = vunpack.c.h.b16 %v396
    %v1696 = vunpack.c.l.b16 %v397
    %v1697 = vunpack.c.h.b16 %v397
    %v1698 = vunpack.c.l.b16 %v398
    %v1699 = vunpack.c.h.b16 %v398
    %v1700 = vunpack.c.l.b16 %v399
    %v1701 = vunpack.c.h.b16 %v399
    %v1702 = vunpack.c.l.b16 %v400
    %v1703 = vunpack.c.h.b16 %v400
    %v1704 = vunpack.c.l.b16 %v401
    %v1705 = vunpack.c.h.b16 %v401
    %v1706 = vunpack.c.l.b16 %v402
    %v1707 = vunpack.c.h.b16 %v402
    %v1708 = vunpack.c.l.b16 %v403
    %v1709 = vunpack.c.h.b16 %v403
    %v1710 = vunpack.c.l.b16 %v404
    %v1711 = vunpack.c.h.b16 %v404
    %v1712 = vunpack.c.l.b16 %v405
    %v1713 = vunpack.c.h.b16 %v405
    %v1714 = vunpack.c.l.b16 %v406
    %v1715 = vunpack.c.h.b16 %v406
    %v1716 = vunpack.c.l.b16 %v407
    %v1717 = vunpack.c.h.b16 %v407
    %v1718 = vunpack.c.l.b16 %v408
    %v1719 = vunpack.c.h.b16 %v408
    %v1720 = vunpack.c.l.b16 %v409
    %v1721 = vunpack.c.h.b16 %v409
    %v1722 = vunpack.c.l.b16 %v410
    %v1723 = vunpack.c.h.b16 %v410
    %v1724 = vunpack.c.l.b16 %v411
    %v1725 = vunpack.c.h.b16 %v411
    %v1726 = vunpack.c.l.b16 %v412
    %v1727 = vunpack.c.h.b16 %v412
    %v1728 = vunpack.c.l.b16 %v413
    %v1729 = vunpack.c.h.b16 %v413
    %v1730 = vunpack.c.l.b16 %v414
    %v1731 = vunpack.c.h.b16 %v414
    %v1732 = vunpack.c.l.b16 %v415
    %v1733 = vunpack.c.h.b16 %v415
    %v1734 = vunpack.c.l.b16 %v416
    %v1735 = vunpack.c.h.b16 %v416
    %v1736 = vunpack.c.l.b16 %v417
    %v1737 = vunpack.c.h.b16 %v417
    %v1738 = vunpack.c.l.b16 %v418
    %v1739 = vunpack.c.h.b16 %v418
    %v1740 = vunpack.c.l.b16 %v419
    %v1741 = vunpack.c.h.b16 %v419
    %v1742 = vunpack.c.l.b16 %v420
    %v1743 = vunpack.c.h.b16 %v420
    %v1744 = vunpack.c.l.b16 %v421
    %v1745 = vunpack.c.h.b16 %v421
    %v1746 = vunpack.c.l.b16 %v422
    %v1747 = vunpack.c.h.b16 %v422
    %v1748 = vunpack.c.l.b16 %v423
    %v1749 = vunpack.c.h.b16 %v423
    %v1750 = vunpack.c.l.b16 %v424
    %v1751 = vunpack.c.h.b16 %v424
    %v1752 = vunpack.c.l.b16 %v425
    %v1753 = vunpack.c.h.b16 %v425
    %v1754 = vunpack.c.l.b16 %v426
    %v1755 = vunpack.c.h.b16 %v426
    %v1756 = vunpack.c.l.b16 %v427
    %v1757 = vunpack.c.h.b16 %v427
    %v1758 = vunpack.c.l.b16 %v428
    %v1759 = vunpack.c.h.b16 %v428
    %v1760 = vunpack.c.l.b16 %v429
    %v1761 = vunpack.c.h.b16 %v429
    %v1762 = vunpack.c.l.b16 %v430
    %v1763 = vunpack.c.h.b16 %v430
    %v1764 = vunpack.c.l.b16 %v431
    %v1765 = vunpack.c.h.b16 %v431
    %v1766 = vunpack.c.l.b16 %v432
    %v1767 = vunpack.c.h.b16 %v432
    %v1768 = vunpack.c.l.b16 %v433
    %v1769 = vunpack.c.h.b16 %v433
    %v1770 = vunpack.c.l.b16 %v434
    %v1771 = vunpack.c.h.b16 %v434
    %v1772 = vunpack.c.l.b16 %v435
    %v1773 = vunpack.c.h.b16 %v435
    %v1774 = vunpack.c.l.b16 %v436
    %v1775 = vunpack.c.h.b16 %v436
    %v1776 = vunpack.c.l.b16 %v437
    %v1777 = vunpack.c.h.b16 %v437
    %v1778 = vunpack.c.l.b16 %v438
    %v1779 = vunpack.c.h.b16 %v438
    %v1780 = vunpack.c.l.b16 %v439
    %v1781 = vunpack.c.h.b16 %v439
    %v1782 = vunpack.c.l.b16 %v440
    %v1783 = vunpack.c.h.b16 %v440
    %v1784 = vunpack.c.l.b16 %v441
    %v1785 = vunpack.c.h.b16 %v441
    %v1786 = vunpack.c.l.b16 %v442
    %v1787 = vunpack.c.h.b16 %v442
    %v1788 = vunpack.c.l.b16 %v443
    %v1789 = vunpack.c.h.b16 %v443
    %v1790 = vunpack.c.l.b16 %v444
    %v1791 = vunpack.c.h.b16 %v444
    %v1792 = vunpack.c.l.b16 %v445
    %v1793 = vunpack.c.h.b16 %v445
    %v1794 = vunpack.c.l.b16 %v446
    %v1795 = vunpack.c.h.b16 %v446
    %v1796 = vunpack.c.l.b16 %v447
    %v1797 = vunpack.c.h.b16 %v447
    %v1798 = vunpack.c.l.b16 %v448
    %v1799 = vunpack.c.h.b16 %v448
    %v1800 = vunpack.c.l.b16 %v449
    %v1801 = vunpack.c.h.b16 %v449
    %v1802 = vunpack.c.l.b16 %v450
    %v1803 = vunpack.c.h.b16 %v450
    %v1804 = vunpack.c.l.b16 %v451
    %v1805 = vunpack.c.h.b16 %v451
    %v1806 = vunpack.c.l.b16 %v452
    %v1807 = vunpack.c.h.b16 %v452
    %v1808 = vunpack.c.l.b16 %v453
    %v1809 = vunpack.c.h.b16 %v453
    %v1810 = vunpack.c.l.b16 %v454
    %v1811 = vunpack.c.h.b16 %v454
    %v1812 = vunpack.c.l.b16 %v455
    %v1813 = vunpack.c.h.b16 %v455
    %v1814 = vunpack.c.l.b16 %v456
    %v1815 = vunpack.c.h.b16 %v456
    %v1816 = vunpack.c.l.b16 %v457
    %v1817 = vunpack.c.h.b16 %v457
    %v1818 = vunpack.c.l.b16 %v458
    %v1819 = vunpack.c.h.b16 %v458
    %v1820 = vunpack.c.l.b16 %v459
    %v1821 = vunpack.c.h.b16 %v459
    %v1822 = vunpack.c.l.b16 %v460
    %v1823 = vunpack.c.h.b16 %v460
    %v1824 = vunpack.c.l.b16 %v461
    %v1825 = vunpack.c.h.b16 %v461
    %v1826 = vunpack.c.l.b16 %v462
    %v1827 = vunpack.c.h.b16 %v462
    %v1828 = vunpack.c.l.b16 %v463
    %v1829 = vunpack.c.h.b16 %v463
    %v1830 = vunpack.c.l.b16 %v464
    %v1831 = vunpack.c.h.b16 %v464
    %v1832 = vunpack.c.l.b16 %v465
    %v1833 = vunpack.c.h.b16 %v465
    %v1834 = vunpack.c.l.b16 %v466
    %v1835 = vunpack.c.h.b16 %v466
    %v1836 = vunpack.c.l.b16 %v467
    %v1837 = vunpack.c.h.b16 %v467
    %v1838 = vunpack.c.l.b16 %v468
    %v1839 = vunpack.c.h.b16 %v468
    %v1840 = vunpack.c.l.b16 %v469
    %v1841 = vunpack.c.h.b16 %v469
    %v1842 = vunpack.c.l.b16 %v470
    %v1843 = vunpack.c.h.b16 %v470
    %v1844 = vunpack.c.l.b16 %v471
    %v1845 = vunpack.c.h.b16 %v471
    %v1846 = vunpack.c.l.b16 %v472
    %v1847 = vunpack.c.h.b16 %v472
    %v1848 = vunpack.c.l.b16 %v473
    %v1849 = vunpack.c.h.b16 %v473
    %v1850 = vunpack.c.l.b16 %v474
    %v1851 = vunpack.c.h.b16 %v474
    %v1852 = vunpack.c.l.b16 %v475
    %v1853 = vunpack.c.h.b16 %v475
    %v1854 = vunpack.c.l.b16 %v476
    %v1855 = vunpack.c.h.b16 %v476
    %v1856 = vunpack.c.l.b16 %v477
    %v1857 = vunpack.c.h.b16 %v477
    %v1858 = vunpack.c.l.b16 %v478
    %v1859 = vunpack.c.h.b16 %v478
    %v1860 = vunpack.c.l.b16 %v479
    %v1861 = vunpack.c.h.b16 %v479
    %v1862 = vunpack.c.l.b16 %v480
    %v1863 = vunpack.c.h.b16 %v480
    %v1864 = vunpack.c.l.b16 %v481
    %v1865 = vunpack.c.h.b16 %v481
    %v1866 = vunpack.c.l.b16 %v482
    %v1867 = vunpack.c.h.b16 %v482
    %v1868 = vunpack.c.l.b16 %v483
    %v1869 = vunpack.c.h.b16 %v483
    %v1870 = vunpack.c.l.b16 %v484
    %v1871 = vunpack.c.h.b16 %v484
    %v1872 = vunpack.c.l.b16 %v485
    %v1873 = vunpack.c.h.b16 %v485
    %v1874 = vunpack.c.l.b16 %v486
    %v1875 = vunpack.c.h.b16 %v486
    %v1876 = vunpack.c.l.b16 %v487
    %v1877 = vunpack.c.h.b16 %v487
    %v1878 = vunpack.c.l.b16 %v488
    %v1879 = vunpack.c.h.b16 %v488
    %v1880 = vunpack.c.l.b16 %v489
    %v1881 = vunpack.c.h.b16 %v489
    %v1882 = vunpack.c.l.b16 %v490
    %v1883 = vunpack.c.h.b16 %v490
    %v1884 = vunpack.c.l.b16 %v491
    %v1885 = vunpack.c.h.b16 %v491
    %v1886 = vunpack.c.l.b16 %v492
    %v1887 = vunpack.c.h.b16 %v492
    %v1888 = vunpack.c.l.b16 %v493
    %v1889 = vunpack.c.h.b16 %v493
    %v1890 = vunpack.c.l.b16 %v494
    %v1891 = vunpack.c.h.b16 %v494
    %v1892 = vunpack.c.l.b16 %v495
    %v1893 = vunpack.c.h.b16 %v495
    %v1894 = vunpack.c.l.b16 %v496
    %v1895 = vunpack.c.h.b16 %v496
    %v1896 = vunpack.c.l.b16 %v497
    %v1897 = vunpack.c.h.b16 %v497
    %v1898 = vunpack.c.l.b16 %v498
    %v1899 = vunpack.c.h.b16 %v498
    %v1900 = vunpack.c.l.b16 %v499
    %v1901 = vunpack.c.h.b16 %v499
    %v1902 = vunpack.c.l.b16 %v500
    %v1903 = vunpack.c.h.b16 %v500
    %v1904 = vunpack.c.l.b16 %v501
    %v1905 = vunpack.c.h.b16 %v501
    %v1906 = vunpack.c.l.b16 %v502
    %v1907 = vunpack.c.h.b16 %v502
    %v1908 = vunpack.c.l.b16 %v503
    %v1909 = vunpack.c.h.b16 %v503
    %v1910 = vunpack.c.l.b16 %v504
    %v1911 = vunpack.c.h.b16 %v504
    %v1912 = vunpack.c.l.b16 %v505
    %v1913 = vunpack.c.h.b16 %v505
    %v1914 = vunpack.c.l.b16 %v506
    %v1915 = vunpack.c.h.b16 %v506
    %v1916 = vunpack.c.l.b16 %v507
    %v1917 = vunpack.c.h.b16 %v507
    %v1918 = vunpack.c.l.b16 %v508
    %v1919 = vunpack.c.h.b16 %v508
    %v1920 = vunpack.c.l.b16 %v509
    %v1921 = vunpack.c.h.b16 %v509
    %v1922 = vunpack.c.l.b16 %v510
    %v1923 = vunpack.c.h.b16 %v510
    %v1924 = vunpack.c.l.b16 %v511
    %v1925 = vunpack.c.h.b16 %v511
    %v1926 = vunpack.c.l.b16 %v512
    %v1927 = vunpack.c.h.b16 %v512
    %v1928 = vunpack.c.l.b16 %v513
    %v1929 = vunpack.c.h.b16 %v513
    %v1930 = vunpack.c.l.b16 %v514
    %v1931 = vunpack.c.h.b16 %v514
    %v1932 = vunpack.c.l.b16 %v515
    %v1933 = vunpack.c.h.b16 %v515
    %v1934 = vunpack.c.l.b16 %v516
    %v1935 = vunpack.c.h.b16 %v516
    %v1936 = vunpack.c.l.b16 %v517
    %v1937 = vunpack.c.h.b16 %v517
    %v1938 = vunpack.c.l.b16 %v518
    %v1939 = vunpack.c.h.b16 %v518
    %v1940 = vunpack.c.l.b16 %v519
    %v1941 = vunpack.c.h.b16 %v519
    %v1942 = vunpack.c.l.b16 %v520
    %v1943 = vunpack.c.h.b16 %v520
    %v1944 = vunpack.c.l.b16 %v521
    %v1945 = vunpack.c.h.b16 %v521
    %v1946 = vunpack.c.l.b16 %v522
    %v1947 = vunpack.c.h.b16 %v522
    %v1948 = vunpack.c.l.b16 %v523
    %v1949 = vunpack.c.h.b16 %v523
    %v1950 = vunpack.c.l.b16 %v524
    %v1951 = vunpack.c.h.b16 %v524
    %v1952 = vunpack.c.l.b16 %v525
    %v1953 = vunpack.c.h.b16 %v525
    %v1954 = vunpack.c.l.b16 %v526
    %v1955 = vunpack.c.h.b16 %v526
    %v1956 = vunpack.c.l.b16 %v527
    %v1957 = vunpack.c.h.b16 %v527
    %v1958 = vunpack.c.l.b16 %v528
    %v1959 = vunpack.c.h.b16 %v528
    %v1960 = vunpack.c.l.b16 %v529
    %v1961 = vunpack.c.h.b16 %v529
    %v1962 = vunpack.c.l.b16 %v530
    %v1963 = vunpack.c.h.b16 %v530
    %v1964 = vunpack.c.l.b16 %v531
    %v1965 = vunpack.c.h.b16 %v531
    %v1966 = vunpack.c.l.b16 %v532
    %v1967 = vunpack.c.h.b16 %v532
    %v1968 = vunpack.c.l.b16 %v533
    %v1969 = vunpack.c.h.b16 %v533
    %v1970 = vunpack.c.l.b16 %v534
    %v1971 = vunpack.c.h.b16 %v534
    %v1972 = vunpack.c.l.b16 %v535
    %v1973 = vunpack.c.h.b16 %v535
    %v1974 = vunpack.c.l.b16 %v536
    %v1975 = vunpack.c.h.b16 %v536
    %v1976 = vunpack.c.l.b16 %v537
    %v1977 = vunpack.c.h.b16 %v537
    %v1978 = vpack.c.b16 %v1026, %v1018
    %v1979 = vpack.c.b16 %v1027, %v1019
    %v1980 = vpack.c.b16 %v1028, %v1020
    %v1981 = vpack.c.b16 %v1029, %v1021
    %v1982 = vpack.c.b16 %v1030, %v1022
    %v1983 = vpack.c.b16 %v1031, %v1023
    %v1984 = vpack.c.b16 %v1032, %v1024
    %v1985 = vpack.c.b16 %v1033, %v1025
    %v1986 = vpack.c.b16 %v1042, %v1034
    %v1987 = vpack.c.b16 %v1043, %v1035
    %v1988 = vpack.c.b16 %v1044, %v1036
    %v1989 = vpack.c.b16 %v1045, %v1037
    %v1990 = vpack.c.b16 %v1046, %v1038
    %v1991 = vpack.c.b16 %v1047, %v1039
    %v1992 = vpack.c.b16 %v1048, %v1040
    %v1993 = vpack.c.b16 %v1049, %v1041
    %v1994 = vpack.c.b16 %v1058, %v1050
    %v1995 = vpack.c.b16 %v1059, %v1051
    %v1996 = vpack.c.b16 %v1060, %v1052
    %v1997 = vpack.c.b16 %v1061, %v1053
    %v1998 = vpack.c.b16 %v1062, %v1054
    %v1999 = vpack.c.b16 %v1063, %v1055
    %v2000 = vpack.c.b16 %v1064, %v1056
    %v2001 = vpack.c.b16 %v1065, %v1057
    %v2002 = vpack.c.b16 %v1074, %v1066
    %v2003 = vpack.c.b16 %v1075, %v1067
    %v2004 = vpack.c.b16 %v1076, %v1068
    %v2005 = vpack.c.b16 %v1077, %v1069
    %v2006 = vpack.c.b16 %v1078, %v1070
    %v2007 = vpack.c.b16 %v1079, %v1071
    %v2008 = vpack.c.b16 %v1080, %v1072
    %v2009 = vpack.c.b16 %v1081, %v1073
    %v2010 = vpack.c.b16 %v1090, %v1082
    %v2011 = vpack.c.b16 %v1091, %v1083
    %v2012 = vpack.c.b16 %v1092, %v1084
    %v2013 = vpack.c.b16 %v1093, %v1085
    %v2014 = vpack.c.b16 %v1094, %v1086
    %v2015 = vpack.c.b16 %v1095, %v1087
    %v2016 = vpack.c.b16 %v1096, %v1088
    %v2017 = vpack.c.b16 %v1097, %v1089
    %v2018 = vpack.c.b16 %v1106, %v1098
    %v2019 = vpack.c.b16 %v1107, %v1099
    %v2020 = vpack.c.b16 %v1108, %v1100
    %v2021 = vpack.c.b16 %v1109, %v1101
    %v2022 = vpack.c.b16 %v1110, %v1102
    %v2023 = vpack.c.b16 %v1111, %v1103
    %v2024 = vpack.c.b16 %v1112, %v1104
    %v2025 = vpack.c.b16 %v1113, %v1105
    %v2026 = vpack.c.b16 %v1122, %v1114
    %v2027 = vpack.c.b16 %v1123, %v1115
    %v2028 = vpack.c.b16 %v1124, %v1116
    %v2029 = vpack.c.b16 %v1125, %v1117
    %v2030 = vpack.c.b16 %v1126, %v1118
    %v2031 = vpack.c.b16 %v1127, %v1119
    %v2032 = vpack.c.b16 %v1128, %v1120
    %v2033 = vpack.c.b16 %v1129, %v1121
    %v2034 = vpack.c.b16 %v1138, %v1130
    %v2035 = vpack.c.b16 %v1139, %v1131
    %v2036 = vpack.c.b16 %v1140, %v1132
    %v2037 = vpack.c.b16 %v1141, %v1133
    %v2038 = vpack.c.b16 %v1142, %v1134
    %v2039 = vpack.c.b16 %v1143, %v1135
    %v2040 = vpack.c.b16 %v1144, %v1136
    %v2041 = vpack.c.b16 %v1145, %v1137
    %v2042 = vpack.c.b16 %v1154, %v1146
    %v2043 = vpack.c.b16 %v1155, %v1147
    %v2044 = vpack.c.b16 %v1156, %v1148
    %v2045 = vpack.c.b16 %v1157, %v1149
    %v2046 = vpack.c.b16 %v1158, %v1150
    %v2047 = vpack.c.b16 %v1159, %v1151
    %v2048 = vpack.c.b16 %v1160, %v1152
    %v2049 = vpack.c.b16 %v1161, %v1153
    %v2050 = vpack.c.b16 %v1170, %v1162
    %v2051 = vpack.c.b16 %v1171, %v1163
    %v2052 = vpack.c.b16 %v1172, %v1164
    %v2053 = vpack.c.b16 %v1173, %v1165
    %v2054 = vpack.c.b16 %v1174, %v1166
    %v2055 = vpack.c.b16 %v1175, %v1167
    %v2056 = vpack.c.b16 %v1176, %v1168
    %v2057 = vpack.c.b16 %v1177, %v1169
    %v2058 = vpack.c.b16 %v1186, %v1178
    %v2059 = vpack.c.b16 %v1187, %v1179
    %v2060 = vpack.c.b16 %v1188, %v1180
    %v2061 = vpack.c.b16 %v1189, %v1181
    %v2062 = vpack.c.b16 %v1190, %v1182
    %v2063 = vpack.c.b16 %v1191, %v1183
    %v2064 = vpack.c.b16 %v1192, %v1184
    %v2065 = vpack.c.b16 %v1193, %v1185
    %v2066 = vpack.c.b16 %v1202, %v1194
    %v2067 = vpack.c.b16 %v1203, %v1195
    %v2068 = vpack.c.b16 %v1204, %v1196
    %v2069 = vpack.c.b16 %v1205, %v1197
    %v2070 = vpack.c.b16 %v1206, %v1198
    %v2071 = vpack.c.b16 %v1207, %v1199
    %v2072 = vpack.c.b16 %v1208, %v1200
    %v2073 = vpack.c.b16 %v1209, %v1201
    %v2074 = vpack.c.b16 %v1218, %v1210
    %v2075 = vpack.c.b16 %v1219, %v1211
    %v2076 = vpack.c.b16 %v1220, %v1212
    %v2077 = vpack.c.b16 %v1221, %v1213
    %v2078 = vpack.c.b16 %v1222, %v1214
    %v2079 = vpack.c.b16 %v1223, %v1215
    %v2080 = vpack.c.b16 %v1224, %v1216
    %v2081 = vpack.c.b16 %v1225, %v1217
    %v2082 = vpack.c.b16 %v1234, %v1226
    %v2083 = vpack.c.b16 %v1235, %v1227
    %v2084 = vpack.c.b16 %v1236, %v1228
    %v2085 = vpack.c.b16 %v1237, %v1229
    %v2086 = vpack.c.b16 %v1238, %v1230
    %v2087 = vpack.c.b16 %v1239, %v1231
    %v2088 = vpack.c.b16 %v1240, %v1232
    %v2089 = vpack.c.b16 %v1241, %v1233
    %v2090 = vpack.c.b16 %v1250, %v1242
    %v2091 = vpack.c.b16 %v1251, %v1243
    %v2092 = vpack.c.b16 %v1252, %v1244
    %v2093 = vpack.c.b16 %v1253, %v1245
    %v2094 = vpack.c.b16 %v1254, %v1246
    %v2095 = vpack.c.b16 %v1255, %v1247
    %v2096 = vpack.c.b16 %v1256, %v1248
    %v2097 = vpack.c.b16 %v1257, %v1249
    %v2098 = vpack.c.b16 %v1266, %v1258
    %v2099 = vpack.c.b16 %v1267, %v1259
    %v2100 = vpack.c.b16 %v1268, %v1260
    %v2101 = vpack.c.b16 %v1269, %v1261
    %v2102 = vpack.c.b16 %v1270, %v1262
    %v2103 = vpack.c.b16 %v1271, %v1263
    %v2104 = vpack.c.b16 %v1272, %v1264
    %v2105 = vpack.c.b16 %v1273, %v1265
    %v2106 = vpack.c.b16 %v1282, %v1274
    %v2107 = vpack.c.b16 %v1283, %v1275
    %v2108 = vpack.c.b16 %v1284, %v1276
    %v2109 = vpack.c.b16 %v1285, %v1277
    %v2110 = vpack.c.b16 %v1286, %v1278
    %v2111 = vpack.c.b16 %v1287, %v1279
    %v2112 = vpack.c.b16 %v1288, %v1280
    %v2113 = vpack.c.b16 %v1289, %v1281
    %v2114 = vpack.c.b16 %v1298, %v1290
    %v2115 = vpack.c.b16 %v1299, %v1291
    %v2116 = vpack.c.b16 %v1300, %v1292
    %v2117 = vpack.c.b16 %v1301, %v1293
    %v2118 = vpack.c.b16 %v1302, %v1294
    %v2119 = vpack.c.b16 %v1303, %v1295
    %v2120 = vpack.c.b16 %v1304, %v1296
    %v2121 = vpack.c.b16 %v1305, %v1297
    %v2122 = vpack.c.b16 %v1314, %v1306
    %v2123 = vpack.c.b16 %v1315, %v1307
    %v2124 = vpack.c.b16 %v1316, %v1308
    %v2125 = vpack.c.b16 %v1317, %v1309
    %v2126 = vpack.c.b16 %v1318, %v1310
    %v2127 = vpack.c.b16 %v1319, %v1311
    %v2128 = vpack.c.b16 %v1320, %v1312
    %v2129 = vpack.c.b16 %v1321, %v1313
    %v2130 = vpack.c.b16 %v1330, %v1322
    %v2131 = vpack.c.b16 %v1331, %v1323
    %v2132 = vpack.c.b16 %v1332, %v1324
    %v2133 = vpack.c.b16 %v1333, %v1325
    %v2134 = vpack.c.b16 %v1334, %v1326
    %v2135 = vpack.c.b16 %v1335, %v1327
    %v2136 = vpack.c.b16 %v1336, %v1328
    %v2137 = vpack.c.b16 %v1337, %v1329
    %v2138 = vpack.c.b16 %v1346, %v1338
    %v2139 = vpack.c.b16 %v1347, %v1339
    %v2140 = vpack.c.b16 %v1348, %v1340
    %v2141 = vpack.c.b16 %v1349, %v1341
    %v2142 = vpack.c.b16 %v1350, %v1342
    %v2143 = vpack.c.b16 %v1351, %v1343
    %v2144 = vpack.c.b16 %v1352, %v1344
    %v2145 = vpack.c.b16 %v1353, %v1345
    %v2146 = vpack.c.b16 %v1362, %v1354
    %v2147 = vpack.c.b16 %v1363, %v1355
    %v2148 = vpack.c.b16 %v1364, %v1356
    %v2149 = vpack.c.b16 %v1365, %v1357
    %v2150 = vpack.c.b16 %v1366, %v1358
    %v2151 = vpack.c.b16 %v1367, %v1359
    %v2152 = vpack.c.b16 %v1368, %v1360
    %v2153 = vpack.c.b16 %v1369, %v1361
    %v2154 = vpack.c.b16 %v1378, %v1370
    %v2155 = vpack.c.b16 %v1379, %v1371
    %v2156 = vpack.c.b16 %v1380, %v1372
    %v2157 = vpack.c.b16 %v1381, %v1373
    %v2158 = vpack.c.b16 %v1382, %v1374
    %v2159 = vpack.c.b16 %v1383, %v1375
    %v2160 = vpack.c.b16 %v1384, %v1376
    %v2161 = vpack.c.b16 %v1385, %v1377
    %v2162 = vpack.c.b16 %v1394, %v1386
    %v2163 = vpack.c.b16 %v1395, %v1387
    %v2164 = vpack.c.b16 %v1396, %v1388
    %v2165 = vpack.c.b16 %v1397, %v1389
    %v2166 = vpack.c.b16 %v1398, %v1390
    %v2167 = vpack.c.b16 %v1399, %v1391
    %v2168 = vpack.c.b16 %v1400, %v1392
    %v2169 = vpack.c.b16 %v1401, %v1393
    %v2170 = vpack.c.b16 %v1410, %v1402
    %v2171 = vpack.c.b16 %v1411, %v1403
    %v2172 = vpack.c.b16 %v1412, %v1404
    %v2173 = vpack.c.b16 %v1413, %v1405
    %v2174 = vpack.c.b16 %v1414, %v1406
    %v2175 = vpack.c.b16 %v1415, %v1407
    %v2176 = vpack.c.b16 %v1416, %v1408
    %v2177 = vpack.c.b16 %v1417, %v1409
    %v2178 = vpack.c.b16 %v1426, %v1418
    %v2179 = vpack.c.b16 %v1427, %v1419
    %v2180 = vpack.c.b16 %v1428, %v1420
    %v2181 = vpack.c.b16 %v1429, %v1421
    %v2182 = vpack.c.b16 %v1430, %v1422
    %v2183 = vpack.c.b16 %v1431, %v1423
    %v2184 = vpack.c.b16 %v1432, %v1424
    %v2185 = vpack.c.b16 %v1433, %v1425
    %v2186 = vpack.c.b16 %v1442, %v1434
    %v2187 = vpack.c.b16 %v1443, %v1435
    %v2188 = vpack.c.b16 %v1444, %v1436
    %v2189 = vpack.c.b16 %v1445, %v1437
    %v2190 = vpack.c.b16 %v1446, %v1438
    %v2191 = vpack.c.b16 %v1447, %v1439
    %v2192 = vpack.c.b16 %v1448, %v1440
    %v2193 = vpack.c.b16 %v1449, %v1441
    %v2194 = vpack.c.b16 %v1458, %v1450
    %v2195 = vpack.c.b16 %v1459, %v1451
    %v2196 = vpack.c.b16 %v1460, %v1452
    %v2197 = vpack.c.b16 %v1461, %v1453
    %v2198 = vpack.c.b16 %v1462, %v1454
    %v2199 = vpack.c.b16 %v1463, %v1455
    %v2200 = vpack.c.b16 %v1464, %v1456
    %v2201 = vpack.c.b16 %v1465, %v1457
    %v2202 = vpack.c.b16 %v1474, %v1466
    %v2203 = vpack.c.b16 %v1475, %v1467
    %v2204 = vpack.c.b16 %v1476, %v1468
    %v2205 = vpack.c.b16 %v1477, %v1469
    %v2206 = vpack.c.b16 %v1478, %v1470
    %v2207 = vpack.c.b16 %v1479, %v1471
    %v2208 = vpack.c.b16 %v1480, %v1472
    %v2209 = vpack.c.b16 %v1481, %v1473
    %v2210 = vpack.c.b16 %v1490, %v1482
    %v2211 = vpack.c.b16 %v1491, %v1483
    %v2212 = vpack.c.b16 %v1492, %v1484
    %v2213 = vpack.c.b16 %v1493, %v1485
    %v2214 = vpack.c.b16 %v1494, %v1486
    %v2215 = vpack.c.b16 %v1495, %v1487
    %v2216 = vpack.c.b16 %v1496, %v1488
    %v2217 = vpack.c.b16 %v1497, %v1489
    %v2218 = vpack.c.b16 %v1506, %v1498
    %v2219 = vpack.c.b16 %v1507, %v1499
    %v2220 = vpack.c.b16 %v1508, %v1500
    %v2221 = vpack.c.b16 %v1509, %v1501
    %v2222 = vpack.c.b16 %v1510, %v1502
    %v2223 = vpack.c.b16 %v1511, %v1503
    %v2224 = vpack.c.b16 %v1512, %v1504
    %v2225 = vpack.c.b16 %v1513, %v1505
    %v2226 = vpack.c.b16 %v1522, %v1514
    %v2227 = vpack.c.b16 %v1523, %v1515
    %v2228 = vpack.c.b16 %v1524, %v1516
    %v2229 = vpack.c.b16 %v1525, %v1517
    %v2230 = vpack.c.b16 %v1526, %v1518
    %v2231 = vpack.c.b16 %v1527, %v1519
    %v2232 = vpack.c.b16 %v1528, %v1520
    %v2233 = vpack.c.b16 %v1529, %v1521
    %v2234 = vpack.c.b16 %v1538, %v1530
    %v2235 = vpack.c.b16 %v1539, %v1531
    %v2236 = vpack.c.b16 %v1540, %v1532
    %v2237 = vpack.c.b16 %v1541, %v1533
    %v2238 = vpack.c.b16 %v1542, %v1534
    %v2239 = vpack.c.b16 %v1543, %v1535
    %v2240 = vpack.c.b16 %v1544, %v1536
    %v2241 = vpack.c.b16 %v1545, %v1537
    %v2242 = vpack.c.b16 %v1554, %v1546
    %v2243 = vpack.c.b16 %v1555, %v1547
    %v2244 = vpack.c.b16 %v1556, %v1548
    %v2245 = vpack.c.b16 %v1557, %v1549
    %v2246 = vpack.c.b16 %v1558, %v1550
    %v2247 = vpack.c.b16 %v1559, %v1551
    %v2248 = vpack.c.b16 %v1560, %v1552
    %v2249 = vpack.c.b16 %v1561, %v1553
    %v2250 = vpack.c.b16 %v1570, %v1562
    %v2251 = vpack.c.b16 %v1571, %v1563
    %v2252 = vpack.c.b16 %v1572, %v1564
    %v2253 = vpack.c.b16 %v1573, %v1565
    %v2254 = vpack.c.b16 %v1574, %v1566
    %v2255 = vpack.c.b16 %v1575, %v1567
    %v2256 = vpack.c.b16 %v1576, %v1568
    %v2257 = vpack.c.b16 %v1577, %v1569
    %v2258 = vpack.c.b16 %v1586, %v1578
    %v2259 = vpack.c.b16 %v1587, %v1579
    %v2260 = vpack.c.b16 %v1588, %v1580
    %v2261 = vpack.c.b16 %v1589, %v1581
    %v2262 = vpack.c.b16 %v1590, %v1582
    %v2263 = vpack.c.b16 %v1591, %v1583
    %v2264 = vpack.c.b16 %v1592, %v1584
    %v2265 = vpack.c.b16 %v1593, %v1585
    %v2266 = vpack.c.b16 %v1602, %v1594
    %v2267 = vpack.c.b16 %v1603, %v1595
    %v2268 = vpack.c.b16 %v1604, %v1596
    %v2269 = vpack.c.b16 %v1605, %v1597
    %v2270 = vpack.c.b16 %v1606, %v1598
    %v2271 = vpack.c.b16 %v1607, %v1599
    %v2272 = vpack.c.b16 %v1608, %v1600
    %v2273 = vpack.c.b16 %v1609, %v1601
    %v2274 = vpack.c.b16 %v1618, %v1610
    %v2275 = vpack.c.b16 %v1619, %v1611
    %v2276 = vpack.c.b16 %v1620, %v1612
    %v2277 = vpack.c.b16 %v1621, %v1613
    %v2278 = vpack.c.b16 %v1622, %v1614
    %v2279 = vpack.c.b16 %v1623, %v1615
    %v2280 = vpack.c.b16 %v1624, %v1616
    %v2281 = vpack.c.b16 %v1625, %v1617
    %v2282 = vpack.c.b16 %v1634, %v1626
    %v2283 = vpack.c.b16 %v1635, %v1627
    %v2284 = vpack.c.b16 %v1636, %v1628
    %v2285 = vpack.c.b16 %v1637, %v1629
    %v2286 = vpack.c.b16 %v1638, %v1630
    %v2287 = vpack.c.b16 %v1639, %v1631
    %v2288 = vpack.c.b16 %v1640, %v1632
    %v2289 = vpack.c.b16 %v1641, %v1633
    %v2290 = vpack.c.b16 %v1650, %v1642
    %v2291 = vpack.c.b16 %v1651, %v1643
    %v2292 = vpack.c.b16 %v1652, %v1644
    %v2293 = vpack.c.b16 %v1653, %v1645
    %v2294 = vpack.c.b16 %v1654, %v1646
    %v2295 = vpack.c.b16 %v1655, %v1647
    %v2296 = vpack.c.b16 %v1656, %v1648
    %v2297 = vpack.c.b16 %v1657, %v1649
    %v2298 = vpack.c.b16 %v1666, %v1658
    %v2299 = vpack.c.b16 %v1667, %v1659
    %v2300 = vpack.c.b16 %v1668, %v1660
    %v2301 = vpack.c.b16 %v1669, %v1661
    %v2302 = vpack.c.b16 %v1670, %v1662
    %v2303 = vpack.c.b16 %v1671, %v1663
    %v2304 = vpack.c.b16 %v1672, %v1664
    %v2305 = vpack.c.b16 %v1673, %v1665
    %v2306 = vpack.c.b16 %v1682, %v1674
    %v2307 = vpack.c.b16 %v1683, %v1675
    %v2308 = vpack.c.b16 %v1684, %v1676
    %v2309 = vpack.c.b16 %v1685, %v1677
    %v2310 = vpack.c.b16 %v1686, %v1678
    %v2311 = vpack.c.b16 %v1687, %v1679
    %v2312 = vpack.c.b16 %v1688, %v1680
    %v2313 = vpack.c.b16 %v1689, %v1681
    %v2314 = vpack.c.b16 %v1698, %v1690
    %v2315 = vpack.c.b16 %v1699, %v1691
    %v2316 = vpack.c.b16 %v1700, %v1692
    %v2317 = vpack.c.b16 %v1701, %v1693
    %v2318 = vpack.c.b16 %v1702, %v1694
    %v2319 = vpack.c.b16 %v1703, %v1695
    %v2320 = vpack.c.b16 %v1704, %v1696
    %v2321 = vpack.c.b16 %v1705, %v1697
    %v2322 = vpack.c.b16 %v1714, %v1706
    %v2323 = vpack.c.b16 %v1715, %v1707
    %v2324 = vpack.c.b16 %v1716, %v1708
    %v2325 = vpack.c.b16 %v1717, %v1709
    %v2326 = vpack.c.b16 %v1718, %v1710
    %v2327 = vpack.c.b16 %v1719, %v1711
    %v2328 = vpack.c.b16 %v1720, %v1712
    %v2329 = vpack.c.b16 %v1721, %v1713
    %v2330 = vpack.c.b16 %v1730, %v1722
    %v2331 = vpack.c.b16 %v1731, %v1723
    %v2332 = vpack.c.b16 %v1732, %v1724
    %v2333 = vpack.c.b16 %v1733, %v1725
    %v2334 = vpack.c.b16 %v1734, %v1726
    %v2335 = vpack.c.b16 %v1735, %v1727
    %v2336 = vpack.c.b16 %v1736, %v1728
    %v2337 = vpack.c.b16 %v1737, %v1729
    %v2338 = vpack.c.b16 %v1746, %v1738
    %v2339 = vpack.c.b16 %v1747, %v1739
    %v2340 = vpack.c.b16 %v1748, %v1740
    %v2341 = vpack.c.b16 %v1749, %v1741
    %v2342 = vpack.c.b16 %v1750, %v1742
    %v2343 = vpack.c.b16 %v1751, %v1743
    %v2344 = vpack.c.b16 %v1752, %v1744
    %v2345 = vpack.c.b16 %v1753, %v1745
    %v2346 = vpack.c.b16 %v1762, %v1754
    %v2347 = vpack.c.b16 %v1763, %v1755
    %v2348 = vpack.c.b16 %v1764, %v1756
    %v2349 = vpack.c.b16 %v1765, %v1757
    %v2350 = vpack.c.b16 %v1766, %v1758
    %v2351 = vpack.c.b16 %v1767, %v1759
    %v2352 = vpack.c.b16 %v1768, %v1760
    %v2353 = vpack.c.b16 %v1769, %v1761
    %v2354 = vpack.c.b16 %v1778, %v1770
    %v2355 = vpack.c.b16 %v1779, %v1771
    %v2356 = vpack.c.b16 %v1780, %v1772
    %v2357 = vpack.c.b16 %v1781, %v1773
    %v2358 = vpack.c.b16 %v1782, %v1774
    %v2359 = vpack.c.b16 %v1783, %v1775
    %v2360 = vpack.c.b16 %v1784, %v1776
    %v2361 = vpack.c.b16 %v1785, %v1777
    %v2362 = vpack.c.b16 %v1794, %v1786
    %v2363 = vpack.c.b16 %v1795, %v1787
    %v2364 = vpack.c.b16 %v1796, %v1788
    %v2365 = vpack.c.b16 %v1797, %v1789
    %v2366 = vpack.c.b16 %v1798, %v1790
    %v2367 = vpack.c.b16 %v1799, %v1791
    %v2368 = vpack.c.b16 %v1800, %v1792
    %v2369 = vpack.c.b16 %v1801, %v1793
    %v2370 = vpack.c.b16 %v1810, %v1802
    %v2371 = vpack.c.b16 %v1811, %v1803
    %v2372 = vpack.c.b16 %v1812, %v1804
    %v2373 = vpack.c.b16 %v1813, %v1805
    %v2374 = vpack.c.b16 %v1814, %v1806
    %v2375 = vpack.c.b16 %v1815, %v1807
    %v2376 = vpack.c.b16 %v1816, %v1808
    %v2377 = vpack.c.b16 %v1817, %v1809
    %v2378 = vpack.c.b16 %v1826, %v1818
    %v2379 = vpack.c.b16 %v1827, %v1819
    %v2380 = vpack.c.b16 %v1828, %v1820
    %v2381 = vpack.c.b16 %v1829, %v1821
    %v2382 = vpack.c.b16 %v1830, %v1822
    %v2383 = vpack.c.b16 %v1831, %v1823
    %v2384 = vpack.c.b16 %v1832, %v1824
    %v2385 = vpack.c.b16 %v1833, %v1825
    %v2386 = vpack.c.b16 %v1842, %v1834
    %v2387 = vpack.c.b16 %v1843, %v1835
    %v2388 = vpack.c.b16 %v1844, %v1836
    %v2389 = vpack.c.b16 %v1845, %v1837
    %v2390 = vpack.c.b16 %v1846, %v1838
    %v2391 = vpack.c.b16 %v1847, %v1839
    %v2392 = vpack.c.b16 %v1848, %v1840
    %v2393 = vpack.c.b16 %v1849, %v1841
    %v2394 = vpack.c.b16 %v1858, %v1850
    %v2395 = vpack.c.b16 %v1859, %v1851
    %v2396 = vpack.c.b16 %v1860, %v1852
    %v2397 = vpack.c.b16 %v1861, %v1853
    %v2398 = vpack.c.b16 %v1862, %v1854
    %v2399 = vpack.c.b16 %v1863, %v1855
    %v2400 = vpack.c.b16 %v1864, %v1856
    %v2401 = vpack.c.b16 %v1865, %v1857
    %v2402 = vpack.c.b16 %v1874, %v1866
    %v2403 = vpack.c.b16 %v1875, %v1867
    %v2404 = vpack.c.b16 %v1876, %v1868
    %v2405 = vpack.c.b16 %v1877, %v1869
    %v2406 = vpack.c.b16 %v1878, %v1870
    %v2407 = vpack.c.b16 %v1879, %v1871
    %v2408 = vpack.c.b16 %v1880, %v1872
    %v2409 = vpack.c.b16 %v1881, %v1873
    %v2410 = vpack.c.b16 %v1890, %v1882
    %v2411 = vpack.c.b16 %v1891, %v1883
    %v2412 = vpack.c.b16 %v1892, %v1884
    %v2413 = vpack.c.b16 %v1893, %v1885
    %v2414 = vpack.c.b16 %v1894, %v1886
    %v2415 = vpack.c.b16 %v1895, %v1887
    %v2416 = vpack.c.b16 %v1896, %v1888
    %v2417 = vpack.c.b16 %v1897, %v1889
    %v2418 = vpack.c.b16 %v1906, %v1898
    %v2419 = vpack.c.b16 %v1907, %v1899
    %v2420 = vpack.c.b16 %v1908, %v1900
    %v2421 = vpack.c.b16 %v1909, %v1901
    %v2422 = vpack.c.b16 %v1910, %v1902
    %v2423 = vpack.c.b16 %v1911, %v1903
    %v2424 = vpack.c.b16 %v1912, %v1904
    %v2425 = vpack.c.b16 %v1913, %v1905
    %v2426 = vpack.c.b16 %v1922, %v1914
    %v2427 = vpack.c.b16 %v1923, %v1915
    %v2428 = vpack.c.b16 %v1924, %v1916
    %v2429 = vpack.c.b16 %v1925, %v1917
    %v2430 = vpack.c.b16 %v1926, %v1918
    %v2431 = vpack.c.b16 %v1927, %v1919
    %v2432 = vpack.c.b16 %v1928, %v1920
    %v2433 = vpack.c.b16 %v1929, %v1921
    %v2434 = vpack.c.b16 %v1938, %v1930
    %v2435 = vpack.c.b16 %v1939, %v1931
    %v2436 = vpack.c.b16 %v1940, %v1932
    %v2437 = vpack.c.b16 %v1941, %v1933
    %v2438 = vpack.c.b16 %v1942, %v1934
    %v2439 = vpack.c.b16 %v1943, %v1935
    %v2440 = vpack.c.b16 %v1944, %v1936
    %v2441 = vpack.c.b16 %v1945, %v1937
    %v2442 = vpack.c.b16 %v1954, %v1946
    %v2443 = vpack.c.b16 %v1955, %v1947
    %v2444 = vpack.c.b16 %v1956, %v1948
    %v2445 = vpack.c.b16 %v1957, %v1949
    %v2446 = vpack.c.b16 %v1958, %v1950
    %v2447 = vpack.c.b16 %v1959, %v1951
    %v2448 = vpack.c.b16 %v1960, %v1952
    %v2449 = vpack.c.b16 %v1961, %v1953
    %v2450 = vpack.c.b16 %v1970, %v1962
    %v2451 = vpack.c.b16 %v1971, %v1963
    %v2452 = vpack.c.b16 %v1972, %v1964
    %v2453 = vpack.c.b16 %v1973, %v1965
    %v2454 = vpack.c.b16 %v1974, %v1966
    %v2455 = vpack.c.b16 %v1975, %v1967
    %v2456 = vpack.c.b16 %v1976, %v1968
    %v2457 = vpack.c.b16 %v1977, %v1969
    %vm2938 = vcmask 523264
    %v2940 = vsel %vm2938, %v57, 0
    %2942 = vmatprep.subr.bf16.mxu0 %v1979
    %2943 = vmatpush1.bf16.msra.mxu0 %v1978
    %2944 = vmatprep.subr.bf16.mxu0 %v1987
    %2945 = vmatpush1.bf16.msra.mxu0 %v1986
    %2946 = vmatprep.subr.bf16.mxu0 %v1995
    %2947 = vmatpush1.bf16.msra.mxu0 %v1994
    %2948 = vmatprep.subr.bf16.mxu0 %v2003
    %2949 = vmatpush1.bf16.msra.mxu0 %v2002
    %2950 = vmatprep.subr.bf16.mxu0 %v2011
    %2951 = vmatpush1.bf16.msra.mxu0 %v2010
    %2952 = vmatprep.subr.bf16.mxu0 %v2019
    %2953 = vmatpush1.bf16.msra.mxu0 %v2018
    %2954 = vmatprep.subr.bf16.mxu0 %v2027
    %2955 = vmatpush1.bf16.msra.mxu0 %v2026
    %2956 = vmatprep.subr.bf16.mxu0 %v2035
    %2957 = vmatpush1.bf16.msra.mxu0 %v2034
    %2958 = vmatprep.subr.bf16.mxu0 %v2043
    %2959 = vmatpush1.bf16.msra.mxu0 %v2042
    %2960 = vmatprep.subr.bf16.mxu0 %v2051
    %2961 = vmatpush1.bf16.msra.mxu0 %v2050
    %2962 = vmatprep.subr.bf16.mxu0 %v2059
    %2963 = vmatpush1.bf16.msra.mxu0 %v2058
    %2964 = vmatprep.subr.bf16.mxu0 %v2067
    %2965 = vmatpush1.bf16.msra.mxu0 %v2066
    %2966 = vmatprep.subr.bf16.mxu0 %v2075
    %2967 = vmatpush1.bf16.msra.mxu0 %v2074
    %2968 = vmatprep.subr.bf16.mxu0 %v2083
    %2969 = vmatpush1.bf16.msra.mxu0 %v2082
    %2970 = vmatprep.subr.bf16.mxu0 %v2091
    %2971 = vmatpush1.bf16.msra.mxu0 %v2090
    %2972 = vmatprep.subr.bf16.mxu0 %v2099
    %2973 = vmatpush1.bf16.msra.mxu0 %v2098
    %2974 = vmatprep.mubr.bf16.mxu0 %v51
    %2975 = vmatmul.mubr.bf16.gmra.mrb[0].mxu0 %v50
    %v2976 = vpop.f32.mrb[0].mxu0
    %v2977 = vadd.f32 0.0, %v2976
    %v2978 = vpop.f32.mrb[0].mxu0
    %v2979 = vadd.f32 0.0, %v2978
    %v2980 = vpop.f32.mrb[0].mxu0
    %v2981 = vpop.f32.mrb[0].mxu0
    %2982 = vdwg.mxu0
    %2983 = vmatprep.subr.bf16.mxu0 %v2107
    %2984 = vmatpush1.bf16.msra.mxu0 %v2106
    %2985 = vmatprep.subr.bf16.mxu0 %v2115
    %2986 = vmatpush1.bf16.msra.mxu0 %v2114
    %2987 = vmatprep.subr.bf16.mxu0 %v2123
    %2988 = vmatpush1.bf16.msra.mxu0 %v2122
    %2989 = vmatprep.subr.bf16.mxu0 %v2131
    %2990 = vmatpush1.bf16.msra.mxu0 %v2130
    %2991 = vmatprep.subr.bf16.mxu0 %v2139
    %2992 = vmatpush1.bf16.msra.mxu0 %v2138
    %2993 = vmatprep.subr.bf16.mxu0 %v2147
    %2994 = vmatpush1.bf16.msra.mxu0 %v2146
    %2995 = vmatprep.subr.bf16.mxu0 %v2155
    %2996 = vmatpush1.bf16.msra.mxu0 %v2154
    %2997 = vmatprep.subr.bf16.mxu0 %v2163
    %2998 = vmatpush1.bf16.msra.mxu0 %v2162
    %2999 = vmatprep.subr.bf16.mxu0 %v2171
    %3000 = vmatpush1.bf16.msra.mxu0 %v2170
    %3001 = vmatprep.subr.bf16.mxu0 %v2179
    %3002 = vmatpush1.bf16.msra.mxu0 %v2178
    %3003 = vmatprep.subr.bf16.mxu0 %v2187
    %3004 = vmatpush1.bf16.msra.mxu0 %v2186
    %3005 = vmatprep.subr.bf16.mxu0 %v2195
    %3006 = vmatpush1.bf16.msra.mxu0 %v2194
    %3007 = vmatprep.subr.bf16.mxu0 %v2203
    %3008 = vmatpush1.bf16.msra.mxu0 %v2202
    %3009 = vmatprep.subr.bf16.mxu0 %v2211
    %3010 = vmatpush1.bf16.msra.mxu0 %v2210
    %3011 = vmatprep.subr.bf16.mxu0 %v2219
    %3012 = vmatpush1.bf16.msra.mxu0 %v2218
    %3013 = vmatprep.subr.bf16.mxu0 %v2227
    %3014 = vmatpush1.bf16.msra.mxu0 %v2226
    %3015 = vmatprep.mubr.bf16.mxu0 %v53
    %3016 = vmatmul.mubr.bf16.gmra.mrb[0].mxu0 %v52
    %v3017 = vpop.f32.mrb[0].mxu0
    %v3018 = vadd.f32 %v2977, %v3017
    %v3019 = vpop.f32.mrb[0].mxu0
    %v3020 = vadd.f32 %v2979, %v3019
    %v3021 = vpop.f32.mrb[0].mxu0
    %v3022 = vpop.f32.mrb[0].mxu0
    %3023 = vdwg.mxu0
    %3024 = vmatprep.subr.bf16.mxu0 %v2235
    %3025 = vmatpush1.bf16.msra.mxu0 %v2234
    %3026 = vmatprep.subr.bf16.mxu0 %v2243
    %3027 = vmatpush1.bf16.msra.mxu0 %v2242
    %3028 = vmatprep.subr.bf16.mxu0 %v2251
    %3029 = vmatpush1.bf16.msra.mxu0 %v2250
    %3030 = vmatprep.subr.bf16.mxu0 %v2259
    %3031 = vmatpush1.bf16.msra.mxu0 %v2258
    %3032 = vmatprep.subr.bf16.mxu0 %v2267
    %3033 = vmatpush1.bf16.msra.mxu0 %v2266
    %3034 = vmatprep.subr.bf16.mxu0 %v2275
    %3035 = vmatpush1.bf16.msra.mxu0 %v2274
    %3036 = vmatprep.subr.bf16.mxu0 %v2283
    %3037 = vmatpush1.bf16.msra.mxu0 %v2282
    %3038 = vmatprep.subr.bf16.mxu0 %v2291
    %3039 = vmatpush1.bf16.msra.mxu0 %v2290
    %3040 = vmatprep.subr.bf16.mxu0 %v2299
    %3041 = vmatpush1.bf16.msra.mxu0 %v2298
    %3042 = vmatprep.subr.bf16.mxu0 %v2307
    %3043 = vmatpush1.bf16.msra.mxu0 %v2306
    %3044 = vmatprep.subr.bf16.mxu0 %v2315
    %3045 = vmatpush1.bf16.msra.mxu0 %v2314
    %3046 = vmatprep.subr.bf16.mxu0 %v2323
    %3047 = vmatpush1.bf16.msra.mxu0 %v2322
    %3048 = vmatprep.subr.bf16.mxu0 %v2331
    %3049 = vmatpush1.bf16.msra.mxu0 %v2330
    %3050 = vmatprep.subr.bf16.mxu0 %v2339
    %3051 = vmatpush1.bf16.msra.mxu0 %v2338
    %3052 = vmatprep.subr.bf16.mxu0 %v2347
    %3053 = vmatpush1.bf16.msra.mxu0 %v2346
    %3054 = vmatprep.subr.bf16.mxu0 %v2355
    %3055 = vmatpush1.bf16.msra.mxu0 %v2354
    %3056 = vmatprep.mubr.bf16.mxu0 %v55
    %3057 = vmatmul.mubr.bf16.gmra.mrb[0].mxu0 %v54
    %v3058 = vpop.f32.mrb[0].mxu0
    %v3059 = vadd.f32 %v3018, %v3058
    %v3060 = vpop.f32.mrb[0].mxu0
    %v3061 = vadd.f32 %v3020, %v3060
    %v3062 = vpop.f32.mrb[0].mxu0
    %v3063 = vpop.f32.mrb[0].mxu0
    %3064 = vdwg.mxu0
    %3065 = vmatprep.subr.bf16.mxu0 %v2363
    %3066 = vmatpush1.bf16.msra.mxu0 %v2362
    %3067 = vmatprep.subr.bf16.mxu0 %v2371
    %3068 = vmatpush1.bf16.msra.mxu0 %v2370
    %3069 = vmatprep.subr.bf16.mxu0 %v2379
    %3070 = vmatpush1.bf16.msra.mxu0 %v2378
    %3071 = vmatprep.subr.bf16.mxu0 %v2387
    %3072 = vmatpush1.bf16.msra.mxu0 %v2386
    %3073 = vmatprep.subr.bf16.mxu0 %v2395
    %3074 = vmatpush1.bf16.msra.mxu0 %v2394
    %3075 = vmatprep.subr.bf16.mxu0 %v2403
    %3076 = vmatpush1.bf16.msra.mxu0 %v2402
    %3077 = vmatprep.subr.bf16.mxu0 %v2411
    %3078 = vmatpush1.bf16.msra.mxu0 %v2410
    %3079 = vmatprep.subr.bf16.mxu0 %v2419
    %3080 = vmatpush1.bf16.msra.mxu0 %v2418
    %3081 = vmatprep.subr.bf16.mxu0 %v2427
    %3082 = vmatpush1.bf16.msra.mxu0 %v2426
    %3083 = vmatprep.subr.bf16.mxu0 %v2435
    %3084 = vmatpush1.bf16.msra.mxu0 %v2434
    %3085 = vmatprep.subr.bf16.mxu0 %v2443
    %3086 = vmatpush1.bf16.msra.mxu0 %v2442
    %3087 = vmatprep.subr.bf16.mxu0 %v2451
    %3088 = vmatpush1.bf16.msra.mxu0 %v2450
    %3089 = vmatprep.subr.bf16.mxu0 0
    %3090 = vmatpush1.bf16.msra.mxu0 0
    %3091 = vmatprep.subr.bf16.mxu0 0
    %3092 = vmatpush1.bf16.msra.mxu0 0
    %3093 = vmatprep.subr.bf16.mxu0 0
    %3094 = vmatpush1.bf16.msra.mxu0 0
    %3095 = vmatprep.subr.bf16.mxu0 0
    %3096 = vmatpush1.bf16.msra.mxu0 0
    %3097 = vmatprep.mubr.bf16.mxu0 %v2940
    %3098 = vmatmul.mubr.bf16.gmra.mrb[0].mxu0 %v56
    %v3099 = vpop.f32.mrb[0].mxu0
    %v3100 = vadd.f32 %v3059, %v3099
    %v3101 = vpop.f32.mrb[0].mxu0
    %v3102 = vadd.f32 %v3061, %v3101
    %v3103 = vpop.f32.mrb[0].mxu0
    %v3104 = vpop.f32.mrb[0].mxu0
    %3105 = vdwg.mxu0
    %3106 = vmatprep.subr.bf16.mxu0 %v1981
    %3107 = vmatpush1.bf16.msra.mxu0 %v1980
    %3108 = vmatprep.subr.bf16.mxu0 %v1989
    %3109 = vmatpush1.bf16.msra.mxu0 %v1988
    %3110 = vmatprep.subr.bf16.mxu0 %v1997
    %3111 = vmatpush1.bf16.msra.mxu0 %v1996
    %3112 = vmatprep.subr.bf16.mxu0 %v2005
    %3113 = vmatpush1.bf16.msra.mxu0 %v2004
    %3114 = vmatprep.subr.bf16.mxu0 %v2013
    %3115 = vmatpush1.bf16.msra.mxu0 %v2012
    %3116 = vmatprep.subr.bf16.mxu0 %v2021
    %3117 = vmatpush1.bf16.msra.mxu0 %v2020
    %3118 = vmatprep.subr.bf16.mxu0 %v2029
    %3119 = vmatpush1.bf16.msra.mxu0 %v2028
    %3120 = vmatprep.subr.bf16.mxu0 %v2037
    %3121 = vmatpush1.bf16.msra.mxu0 %v2036
    %3122 = vmatprep.subr.bf16.mxu0 %v2045
    %3123 = vmatpush1.bf16.msra.mxu0 %v2044
    %3124 = vmatprep.subr.bf16.mxu0 %v2053
    %3125 = vmatpush1.bf16.msra.mxu0 %v2052
    %3126 = vmatprep.subr.bf16.mxu0 %v2061
    %3127 = vmatpush1.bf16.msra.mxu0 %v2060
    %3128 = vmatprep.subr.bf16.mxu0 %v2069
    %3129 = vmatpush1.bf16.msra.mxu0 %v2068
    %3130 = vmatprep.subr.bf16.mxu0 %v2077
    %3131 = vmatpush1.bf16.msra.mxu0 %v2076
    %3132 = vmatprep.subr.bf16.mxu0 %v2085
    %3133 = vmatpush1.bf16.msra.mxu0 %v2084
    %3134 = vmatprep.subr.bf16.mxu0 %v2093
    %3135 = vmatpush1.bf16.msra.mxu0 %v2092
    %3136 = vmatprep.subr.bf16.mxu0 %v2101
    %3137 = vmatpush1.bf16.msra.mxu0 %v2100
    %3138 = vmatprep.mubr.bf16.mxu0 %v51
    %3139 = vmatmul.mubr.bf16.gmra.mrb[0].mxu0 %v50
    %v3140 = vpop.f32.mrb[0].mxu0
    %v3141 = vadd.f32 0.0, %v3140
    %v3142 = vpop.f32.mrb[0].mxu0
    %v3143 = vadd.f32 0.0, %v3142
    %v3144 = vpop.f32.mrb[0].mxu0
    %v3145 = vpop.f32.mrb[0].mxu0
    %3146 = vdwg.mxu0
    %3147 = vmatprep.subr.bf16.mxu0 %v2109
    %3148 = vmatpush1.bf16.msra.mxu0 %v2108
    %3149 = vmatprep.subr.bf16.mxu0 %v2117
    %3150 = vmatpush1.bf16.msra.mxu0 %v2116
    %3151 = vmatprep.subr.bf16.mxu0 %v2125
    %3152 = vmatpush1.bf16.msra.mxu0 %v2124
    %3153 = vmatprep.subr.bf16.mxu0 %v2133
    %3154 = vmatpush1.bf16.msra.mxu0 %v2132
    %3155 = vmatprep.subr.bf16.mxu0 %v2141
    %3156 = vmatpush1.bf16.msra.mxu0 %v2140
    %3157 = vmatprep.subr.bf16.mxu0 %v2149
    %3158 = vmatpush1.bf16.msra.mxu0 %v2148
    %3159 = vmatprep.subr.bf16.mxu0 %v2157
    %3160 = vmatpush1.bf16.msra.mxu0 %v2156
    %3161 = vmatprep.subr.bf16.mxu0 %v2165
    %3162 = vmatpush1.bf16.msra.mxu0 %v2164
    %3163 = vmatprep.subr.bf16.mxu0 %v2173
    %3164 = vmatpush1.bf16.msra.mxu0 %v2172
    %3165 = vmatprep.subr.bf16.mxu0 %v2181
    %3166 = vmatpush1.bf16.msra.mxu0 %v2180
    %3167 = vmatprep.subr.bf16.mxu0 %v2189
    %3168 = vmatpush1.bf16.msra.mxu0 %v2188
    %3169 = vmatprep.subr.bf16.mxu0 %v2197
    %3170 = vmatpush1.bf16.msra.mxu0 %v2196
    %3171 = vmatprep.subr.bf16.mxu0 %v2205
    %3172 = vmatpush1.bf16.msra.mxu0 %v2204
    %3173 = vmatprep.subr.bf16.mxu0 %v2213
    %3174 = vmatpush1.bf16.msra.mxu0 %v2212
    %3175 = vmatprep.subr.bf16.mxu0 %v2221
    %3176 = vmatpush1.bf16.msra.mxu0 %v2220
    %3177 = vmatprep.subr.bf16.mxu0 %v2229
    %3178 = vmatpush1.bf16.msra.mxu0 %v2228
    %3179 = vmatprep.mubr.bf16.mxu0 %v53
    %3180 = vmatmul.mubr.bf16.gmra.mrb[0].mxu0 %v52
    %v3181 = vpop.f32.mrb[0].mxu0
    %v3182 = vadd.f32 %v3141, %v3181
    %v3183 = vpop.f32.mrb[0].mxu0
    %v3184 = vadd.f32 %v3143, %v3183
    %v3185 = vpop.f32.mrb[0].mxu0
    %v3186 = vpop.f32.mrb[0].mxu0
    %3187 = vdwg.mxu0
    %3188 = vmatprep.subr.bf16.mxu0 %v2237
    %3189 = vmatpush1.bf16.msra.mxu0 %v2236
    %3190 = vmatprep.subr.bf16.mxu0 %v2245
    %3191 = vmatpush1.bf16.msra.mxu0 %v2244
    %3192 = vmatprep.subr.bf16.mxu0 %v2253
    %3193 = vmatpush1.bf16.msra.mxu0 %v2252
    %3194 = vmatprep.subr.bf16.mxu0 %v2261
    %3195 = vmatpush1.bf16.msra.mxu0 %v2260
    %3196 = vmatprep.subr.bf16.mxu0 %v2269
    %3197 = vmatpush1.bf16.msra.mxu0 %v2268
    %3198 = vmatprep.subr.bf16.mxu0 %v2277
    %3199 = vmatpush1.bf16.msra.mxu0 %v2276
    %3200 = vmatprep.subr.bf16.mxu0 %v2285
    %3201 = vmatpush1.bf16.msra.mxu0 %v2284
    %3202 = vmatprep.subr.bf16.mxu0 %v2293
    %3203 = vmatpush1.bf16.msra.mxu0 %v2292
    %3204 = vmatprep.subr.bf16.mxu0 %v2301
    %3205 = vmatpush1.bf16.msra.mxu0 %v2300
    %3206 = vmatprep.subr.bf16.mxu0 %v2309
    %3207 = vmatpush1.bf16.msra.mxu0 %v2308
    %3208 = vmatprep.subr.bf16.mxu0 %v2317
    %3209 = vmatpush1.bf16.msra.mxu0 %v2316
    %3210 = vmatprep.subr.bf16.mxu0 %v2325
    %3211 = vmatpush1.bf16.msra.mxu0 %v2324
    %3212 = vmatprep.subr.bf16.mxu0 %v2333
    %3213 = vmatpush1.bf16.msra.mxu0 %v2332
    %3214 = vmatprep.subr.bf16.mxu0 %v2341
    %3215 = vmatpush1.bf16.msra.mxu0 %v2340
    %3216 = vmatprep.subr.bf16.mxu0 %v2349
    %3217 = vmatpush1.bf16.msra.mxu0 %v2348
    %3218 = vmatprep.subr.bf16.mxu0 %v2357
    %3219 = vmatpush1.bf16.msra.mxu0 %v2356
    %3220 = vmatprep.mubr.bf16.mxu0 %v55
    %3221 = vmatmul.mubr.bf16.gmra.mrb[0].mxu0 %v54
    %v3222 = vpop.f32.mrb[0].mxu0
    %v3223 = vadd.f32 %v3182, %v3222
    %v3224 = vpop.f32.mrb[0].mxu0
    %v3225 = vadd.f32 %v3184, %v3224
    %v3226 = vpop.f32.mrb[0].mxu0
    %v3227 = vpop.f32.mrb[0].mxu0
    %3228 = vdwg.mxu0
    %3229 = vmatprep.subr.bf16.mxu0 %v2365
    %3230 = vmatpush1.bf16.msra.mxu0 %v2364
    %3231 = vmatprep.subr.bf16.mxu0 %v2373
    %3232 = vmatpush1.bf16.msra.mxu0 %v2372
    %3233 = vmatprep.subr.bf16.mxu0 %v2381
    %3234 = vmatpush1.bf16.msra.mxu0 %v2380
    %3235 = vmatprep.subr.bf16.mxu0 %v2389
    %3236 = vmatpush1.bf16.msra.mxu0 %v2388
    %3237 = vmatprep.subr.bf16.mxu0 %v2397
    %3238 = vmatpush1.bf16.msra.mxu0 %v2396
    %3239 = vmatprep.subr.bf16.mxu0 %v2405
    %3240 = vmatpush1.bf16.msra.mxu0 %v2404
    %3241 = vmatprep.subr.bf16.mxu0 %v2413
    %3242 = vmatpush1.bf16.msra.mxu0 %v2412
    %3243 = vmatprep.subr.bf16.mxu0 %v2421
    %3244 = vmatpush1.bf16.msra.mxu0 %v2420
    %3245 = vmatprep.subr.bf16.mxu0 %v2429
    %3246 = vmatpush1.bf16.msra.mxu0 %v2428
    %3247 = vmatprep.subr.bf16.mxu0 %v2437
    %3248 = vmatpush1.bf16.msra.mxu0 %v2436
    %3249 = vmatprep.subr.bf16.mxu0 %v2445
    %3250 = vmatpush1.bf16.msra.mxu0 %v2444
    %3251 = vmatprep.subr.bf16.mxu0 %v2453
    %3252 = vmatpush1.bf16.msra.mxu0 %v2452
    %3253 = vmatprep.subr.bf16.mxu0 0
    %3254 = vmatpush1.bf16.msra.mxu0 0
    %3255 = vmatprep.subr.bf16.mxu0 0
    %3256 = vmatpush1.bf16.msra.mxu0 0
    %3257 = vmatprep.subr.bf16.mxu0 0
    %3258 = vmatpush1.bf16.msra.mxu0 0
    %3259 = vmatprep.subr.bf16.mxu0 0
    %3260 = vmatpush1.bf16.msra.mxu0 0
    %3261 = vmatprep.mubr.bf16.mxu0 %v2940
    %3262 = vmatmul.mubr.bf16.gmra.mrb[0].mxu0 %v56
    %v3263 = vpop.f32.mrb[0].mxu0
    %v3264 = vadd.f32 %v3223, %v3263
    %v3265 = vpop.f32.mrb[0].mxu0
    %v3266 = vadd.f32 %v3225, %v3265
    %v3267 = vpop.f32.mrb[0].mxu0
    %v3268 = vpop.f32.mrb[0].mxu0
    %3269 = vdwg.mxu0
    %3270 = vmatprep.subr.bf16.mxu0 %v1983
    %3271 = vmatpush1.bf16.msra.mxu0 %v1982
    %3272 = vmatprep.subr.bf16.mxu0 %v1991
    %3273 = vmatpush1.bf16.msra.mxu0 %v1990
    %3274 = vmatprep.subr.bf16.mxu0 %v1999
    %3275 = vmatpush1.bf16.msra.mxu0 %v1998
    %3276 = vmatprep.subr.bf16.mxu0 %v2007
    %3277 = vmatpush1.bf16.msra.mxu0 %v2006
    %3278 = vmatprep.subr.bf16.mxu0 %v2015
    %3279 = vmatpush1.bf16.msra.mxu0 %v2014
    %3280 = vmatprep.subr.bf16.mxu0 %v2023
    %3281 = vmatpush1.bf16.msra.mxu0 %v2022
    %3282 = vmatprep.subr.bf16.mxu0 %v2031
    %3283 = vmatpush1.bf16.msra.mxu0 %v2030
    %3284 = vmatprep.subr.bf16.mxu0 %v2039
    %3285 = vmatpush1.bf16.msra.mxu0 %v2038
    %3286 = vmatprep.subr.bf16.mxu0 %v2047
    %3287 = vmatpush1.bf16.msra.mxu0 %v2046
    %3288 = vmatprep.subr.bf16.mxu0 %v2055
    %3289 = vmatpush1.bf16.msra.mxu0 %v2054
    %3290 = vmatprep.subr.bf16.mxu0 %v2063
    %3291 = vmatpush1.bf16.msra.mxu0 %v2062
    %3292 = vmatprep.subr.bf16.mxu0 %v2071
    %3293 = vmatpush1.bf16.msra.mxu0 %v2070
    %3294 = vmatprep.subr.bf16.mxu0 %v2079
    %3295 = vmatpush1.bf16.msra.mxu0 %v2078
    %3296 = vmatprep.subr.bf16.mxu0 %v2087
    %3297 = vmatpush1.bf16.msra.mxu0 %v2086
    %3298 = vmatprep.subr.bf16.mxu0 %v2095
    %3299 = vmatpush1.bf16.msra.mxu0 %v2094
    %3300 = vmatprep.subr.bf16.mxu0 %v2103
    %3301 = vmatpush1.bf16.msra.mxu0 %v2102
    %3302 = vmatprep.mubr.bf16.mxu0 %v51
    %3303 = vmatmul.mubr.bf16.gmra.mrb[0].mxu0 %v50
    %v3304 = vpop.f32.mrb[0].mxu0
    %v3305 = vadd.f32 0.0, %v3304
    %v3306 = vpop.f32.mrb[0].mxu0
    %v3307 = vadd.f32 0.0, %v3306
    %v3308 = vpop.f32.mrb[0].mxu0
    %v3309 = vpop.f32.mrb[0].mxu0
    %3310 = vdwg.mxu0
    %3311 = vmatprep.subr.bf16.mxu0 %v2111
    %3312 = vmatpush1.bf16.msra.mxu0 %v2110
    %3313 = vmatprep.subr.bf16.mxu0 %v2119
    %3314 = vmatpush1.bf16.msra.mxu0 %v2118
    %3315 = vmatprep.subr.bf16.mxu0 %v2127
    %3316 = vmatpush1.bf16.msra.mxu0 %v2126
    %3317 = vmatprep.subr.bf16.mxu0 %v2135
    %3318 = vmatpush1.bf16.msra.mxu0 %v2134
    %3319 = vmatprep.subr.bf16.mxu0 %v2143
    %3320 = vmatpush1.bf16.msra.mxu0 %v2142
    %3321 = vmatprep.subr.bf16.mxu0 %v2151
    %3322 = vmatpush1.bf16.msra.mxu0 %v2150
    %3323 = vmatprep.subr.bf16.mxu0 %v2159
    %3324 = vmatpush1.bf16.msra.mxu0 %v2158
    %3325 = vmatprep.subr.bf16.mxu0 %v2167
    %3326 = vmatpush1.bf16.msra.mxu0 %v2166
    %3327 = vmatprep.subr.bf16.mxu0 %v2175
    %3328 = vmatpush1.bf16.msra.mxu0 %v2174
    %3329 = vmatprep.subr.bf16.mxu0 %v2183
    %3330 = vmatpush1.bf16.msra.mxu0 %v2182
    %3331 = vmatprep.subr.bf16.mxu0 %v2191
    %3332 = vmatpush1.bf16.msra.mxu0 %v2190
    %3333 = vmatprep.subr.bf16.mxu0 %v2199
    %3334 = vmatpush1.bf16.msra.mxu0 %v2198
    %3335 = vmatprep.subr.bf16.mxu0 %v2207
    %3336 = vmatpush1.bf16.msra.mxu0 %v2206
    %3337 = vmatprep.subr.bf16.mxu0 %v2215
    %3338 = vmatpush1.bf16.msra.mxu0 %v2214
    %3339 = vmatprep.subr.bf16.mxu0 %v2223
    %3340 = vmatpush1.bf16.msra.mxu0 %v2222
    %3341 = vmatprep.subr.bf16.mxu0 %v2231
    %3342 = vmatpush1.bf16.msra.mxu0 %v2230
    %3343 = vmatprep.mubr.bf16.mxu0 %v53
    %3344 = vmatmul.mubr.bf16.gmra.mrb[0].mxu0 %v52
    %v3345 = vpop.f32.mrb[0].mxu0
    %v3346 = vadd.f32 %v3305, %v3345
    %v3347 = vpop.f32.mrb[0].mxu0
    %v3348 = vadd.f32 %v3307, %v3347
    %v3349 = vpop.f32.mrb[0].mxu0
    %v3350 = vpop.f32.mrb[0].mxu0
    %3351 = vdwg.mxu0
    %3352 = vmatprep.subr.bf16.mxu0 %v2239
    %3353 = vmatpush1.bf16.msra.mxu0 %v2238
    %3354 = vmatprep.subr.bf16.mxu0 %v2247
    %3355 = vmatpush1.bf16.msra.mxu0 %v2246
    %3356 = vmatprep.subr.bf16.mxu0 %v2255
    %3357 = vmatpush1.bf16.msra.mxu0 %v2254
    %3358 = vmatprep.subr.bf16.mxu0 %v2263
    %3359 = vmatpush1.bf16.msra.mxu0 %v2262
    %3360 = vmatprep.subr.bf16.mxu0 %v2271
    %3361 = vmatpush1.bf16.msra.mxu0 %v2270
    %3362 = vmatprep.subr.bf16.mxu0 %v2279
    %3363 = vmatpush1.bf16.msra.mxu0 %v2278
    %3364 = vmatprep.subr.bf16.mxu0 %v2287
    %3365 = vmatpush1.bf16.msra.mxu0 %v2286
    %3366 = vmatprep.subr.bf16.mxu0 %v2295
    %3367 = vmatpush1.bf16.msra.mxu0 %v2294
    %3368 = vmatprep.subr.bf16.mxu0 %v2303
    %3369 = vmatpush1.bf16.msra.mxu0 %v2302
    %3370 = vmatprep.subr.bf16.mxu0 %v2311
    %3371 = vmatpush1.bf16.msra.mxu0 %v2310
    %3372 = vmatprep.subr.bf16.mxu0 %v2319
    %3373 = vmatpush1.bf16.msra.mxu0 %v2318
    %3374 = vmatprep.subr.bf16.mxu0 %v2327
    %3375 = vmatpush1.bf16.msra.mxu0 %v2326
    %3376 = vmatprep.subr.bf16.mxu0 %v2335
    %3377 = vmatpush1.bf16.msra.mxu0 %v2334
    %3378 = vmatprep.subr.bf16.mxu0 %v2343
    %3379 = vmatpush1.bf16.msra.mxu0 %v2342
    %3380 = vmatprep.subr.bf16.mxu0 %v2351
    %3381 = vmatpush1.bf16.msra.mxu0 %v2350
    %3382 = vmatprep.subr.bf16.mxu0 %v2359
    %3383 = vmatpush1.bf16.msra.mxu0 %v2358
    %3384 = vmatprep.mubr.bf16.mxu0 %v55
    %3385 = vmatmul.mubr.bf16.gmra.mrb[0].mxu0 %v54
    %v3386 = vpop.f32.mrb[0].mxu0
    %v3387 = vadd.f32 %v3346, %v3386
    %v3388 = vpop.f32.mrb[0].mxu0
    %v3389 = vadd.f32 %v3348, %v3388
    %v3390 = vpop.f32.mrb[0].mxu0
    %v3391 = vpop.f32.mrb[0].mxu0
    %3392 = vdwg.mxu0
    %3393 = vmatprep.subr.bf16.mxu0 %v2367
    %3394 = vmatpush1.bf16.msra.mxu0 %v2366
    %3395 = vmatprep.subr.bf16.mxu0 %v2375
    %3396 = vmatpush1.bf16.msra.mxu0 %v2374
    %3397 = vmatprep.subr.bf16.mxu0 %v2383
    %3398 = vmatpush1.bf16.msra.mxu0 %v2382
    %3399 = vmatprep.subr.bf16.mxu0 %v2391
    %3400 = vmatpush1.bf16.msra.mxu0 %v2390
    %3401 = vmatprep.subr.bf16.mxu0 %v2399
    %3402 = vmatpush1.bf16.msra.mxu0 %v2398
    %3403 = vmatprep.subr.bf16.mxu0 %v2407
    %3404 = vmatpush1.bf16.msra.mxu0 %v2406
    %3405 = vmatprep.subr.bf16.mxu0 %v2415
    %3406 = vmatpush1.bf16.msra.mxu0 %v2414
    %3407 = vmatprep.subr.bf16.mxu0 %v2423
    %3408 = vmatpush1.bf16.msra.mxu0 %v2422
    %3409 = vmatprep.subr.bf16.mxu0 %v2431
    %3410 = vmatpush1.bf16.msra.mxu0 %v2430
    %3411 = vmatprep.subr.bf16.mxu0 %v2439
    %3412 = vmatpush1.bf16.msra.mxu0 %v2438
    %3413 = vmatprep.subr.bf16.mxu0 %v2447
    %3414 = vmatpush1.bf16.msra.mxu0 %v2446
    %3415 = vmatprep.subr.bf16.mxu0 %v2455
    %3416 = vmatpush1.bf16.msra.mxu0 %v2454
    %3417 = vmatprep.subr.bf16.mxu0 0
    %3418 = vmatpush1.bf16.msra.mxu0 0
    %3419 = vmatprep.subr.bf16.mxu0 0
    %3420 = vmatpush1.bf16.msra.mxu0 0
    %3421 = vmatprep.subr.bf16.mxu0 0
    %3422 = vmatpush1.bf16.msra.mxu0 0
    %3423 = vmatprep.subr.bf16.mxu0 0
    %3424 = vmatpush1.bf16.msra.mxu0 0
    %3425 = vmatprep.mubr.bf16.mxu0 %v2940
    %3426 = vmatmul.mubr.bf16.gmra.mrb[0].mxu0 %v56
    %v3427 = vpop.f32.mrb[0].mxu0
    %v3428 = vadd.f32 %v3387, %v3427
    %v3429 = vpop.f32.mrb[0].mxu0
    %v3430 = vadd.f32 %v3389, %v3429
    %v3431 = vpop.f32.mrb[0].mxu0
    %v3432 = vpop.f32.mrb[0].mxu0
    %3433 = vdwg.mxu0
    %3434 = vmatprep.subr.bf16.mxu0 %v1985
    %3435 = vmatpush1.bf16.msra.mxu0 %v1984
    %3436 = vmatprep.subr.bf16.mxu0 %v1993
    %3437 = vmatpush1.bf16.msra.mxu0 %v1992
    %3438 = vmatprep.subr.bf16.mxu0 %v2001
    %3439 = vmatpush1.bf16.msra.mxu0 %v2000
    %3440 = vmatprep.subr.bf16.mxu0 %v2009
    %3441 = vmatpush1.bf16.msra.mxu0 %v2008
    %3442 = vmatprep.subr.bf16.mxu0 %v2017
    %3443 = vmatpush1.bf16.msra.mxu0 %v2016
    %3444 = vmatprep.subr.bf16.mxu0 %v2025
    %3445 = vmatpush1.bf16.msra.mxu0 %v2024
    %3446 = vmatprep.subr.bf16.mxu0 %v2033
    %3447 = vmatpush1.bf16.msra.mxu0 %v2032
    %3448 = vmatprep.subr.bf16.mxu0 %v2041
    %3449 = vmatpush1.bf16.msra.mxu0 %v2040
    %3450 = vmatprep.subr.bf16.mxu0 %v2049
    %3451 = vmatpush1.bf16.msra.mxu0 %v2048
    %3452 = vmatprep.subr.bf16.mxu0 %v2057
    %3453 = vmatpush1.bf16.msra.mxu0 %v2056
    %3454 = vmatprep.subr.bf16.mxu0 %v2065
    %3455 = vmatpush1.bf16.msra.mxu0 %v2064
    %3456 = vmatprep.subr.bf16.mxu0 %v2073
    %3457 = vmatpush1.bf16.msra.mxu0 %v2072
    %3458 = vmatprep.subr.bf16.mxu0 %v2081
    %3459 = vmatpush1.bf16.msra.mxu0 %v2080
    %3460 = vmatprep.subr.bf16.mxu0 %v2089
    %3461 = vmatpush1.bf16.msra.mxu0 %v2088
    %3462 = vmatprep.subr.bf16.mxu0 %v2097
    %3463 = vmatpush1.bf16.msra.mxu0 %v2096
    %3464 = vmatprep.subr.bf16.mxu0 %v2105
    %3465 = vmatpush1.bf16.msra.mxu0 %v2104
    %3466 = vmatprep.mubr.bf16.mxu0 %v51
    %3467 = vmatmul.mubr.bf16.gmra.mrb[0].mxu0 %v50
    %v3468 = vpop.f32.mrb[0].mxu0
    %v3469 = vadd.f32 0.0, %v3468
    %v3470 = vpop.f32.mrb[0].mxu0
    %v3471 = vadd.f32 0.0, %v3470
    %v3472 = vpop.f32.mrb[0].mxu0
    %v3473 = vpop.f32.mrb[0].mxu0
    %3474 = vdwg.mxu0
    %3475 = vmatprep.subr.bf16.mxu0 %v2113
    %3476 = vmatpush1.bf16.msra.mxu0 %v2112
    %3477 = vmatprep.subr.bf16.mxu0 %v2121
    %3478 = vmatpush1.bf16.msra.mxu0 %v2120
    %3479 = vmatprep.subr.bf16.mxu0 %v2129
    %3480 = vmatpush1.bf16.msra.mxu0 %v2128
    %3481 = vmatprep.subr.bf16.mxu0 %v2137
    %3482 = vmatpush1.bf16.msra.mxu0 %v2136
    %3483 = vmatprep.subr.bf16.mxu0 %v2145
    %3484 = vmatpush1.bf16.msra.mxu0 %v2144
    %3485 = vmatprep.subr.bf16.mxu0 %v2153
    %3486 = vmatpush1.bf16.msra.mxu0 %v2152
    %3487 = vmatprep.subr.bf16.mxu0 %v2161
    %3488 = vmatpush1.bf16.msra.mxu0 %v2160
    %3489 = vmatprep.subr.bf16.mxu0 %v2169
    %3490 = vmatpush1.bf16.msra.mxu0 %v2168
    %3491 = vmatprep.subr.bf16.mxu0 %v2177
    %3492 = vmatpush1.bf16.msra.mxu0 %v2176
    %3493 = vmatprep.subr.bf16.mxu0 %v2185
    %3494 = vmatpush1.bf16.msra.mxu0 %v2184
    %3495 = vmatprep.subr.bf16.mxu0 %v2193
    %3496 = vmatpush1.bf16.msra.mxu0 %v2192
    %3497 = vmatprep.subr.bf16.mxu0 %v2201
    %3498 = vmatpush1.bf16.msra.mxu0 %v2200
    %3499 = vmatprep.subr.bf16.mxu0 %v2209
    %3500 = vmatpush1.bf16.msra.mxu0 %v2208
    %3501 = vmatprep.subr.bf16.mxu0 %v2217
    %3502 = vmatpush1.bf16.msra.mxu0 %v2216
    %3503 = vmatprep.subr.bf16.mxu0 %v2225
    %3504 = vmatpush1.bf16.msra.mxu0 %v2224
    %3505 = vmatprep.subr.bf16.mxu0 %v2233
    %3506 = vmatpush1.bf16.msra.mxu0 %v2232
    %3507 = vmatprep.mubr.bf16.mxu0 %v53
    %3508 = vmatmul.mubr.bf16.gmra.mrb[0].mxu0 %v52
    %v3509 = vpop.f32.mrb[0].mxu0
    %v3510 = vadd.f32 %v3469, %v3509
    %v3511 = vpop.f32.mrb[0].mxu0
    %v3512 = vadd.f32 %v3471, %v3511
    %v3513 = vpop.f32.mrb[0].mxu0
    %v3514 = vpop.f32.mrb[0].mxu0
    %3515 = vdwg.mxu0
    %3516 = vmatprep.subr.bf16.mxu0 %v2241
    %3517 = vmatpush1.bf16.msra.mxu0 %v2240
    %3518 = vmatprep.subr.bf16.mxu0 %v2249
    %3519 = vmatpush1.bf16.msra.mxu0 %v2248
    %3520 = vmatprep.subr.bf16.mxu0 %v2257
    %3521 = vmatpush1.bf16.msra.mxu0 %v2256
    %3522 = vmatprep.subr.bf16.mxu0 %v2265
    %3523 = vmatpush1.bf16.msra.mxu0 %v2264
    %3524 = vmatprep.subr.bf16.mxu0 %v2273
    %3525 = vmatpush1.bf16.msra.mxu0 %v2272
    %3526 = vmatprep.subr.bf16.mxu0 %v2281
    %3527 = vmatpush1.bf16.msra.mxu0 %v2280
    %3528 = vmatprep.subr.bf16.mxu0 %v2289
    %3529 = vmatpush1.bf16.msra.mxu0 %v2288
    %3530 = vmatprep.subr.bf16.mxu0 %v2297
    %3531 = vmatpush1.bf16.msra.mxu0 %v2296
    %3532 = vmatprep.subr.bf16.mxu0 %v2305
    %3533 = vmatpush1.bf16.msra.mxu0 %v2304
    %3534 = vmatprep.subr.bf16.mxu0 %v2313
    %3535 = vmatpush1.bf16.msra.mxu0 %v2312
    %3536 = vmatprep.subr.bf16.mxu0 %v2321
    %3537 = vmatpush1.bf16.msra.mxu0 %v2320
    %3538 = vmatprep.subr.bf16.mxu0 %v2329
    %3539 = vmatpush1.bf16.msra.mxu0 %v2328
    %3540 = vmatprep.subr.bf16.mxu0 %v2337
    %3541 = vmatpush1.bf16.msra.mxu0 %v2336
    %3542 = vmatprep.subr.bf16.mxu0 %v2345
    %3543 = vmatpush1.bf16.msra.mxu0 %v2344
    %3544 = vmatprep.subr.bf16.mxu0 %v2353
    %3545 = vmatpush1.bf16.msra.mxu0 %v2352
    %3546 = vmatprep.subr.bf16.mxu0 %v2361
    %3547 = vmatpush1.bf16.msra.mxu0 %v2360
    %3548 = vmatprep.mubr.bf16.mxu0 %v55
    %3549 = vmatmul.mubr.bf16.gmra.mrb[0].mxu0 %v54
    %v3550 = vpop.f32.mrb[0].mxu0
    %v3551 = vadd.f32 %v3510, %v3550
    %v3552 = vpop.f32.mrb[0].mxu0
    %v3553 = vadd.f32 %v3512, %v3552
    %v3554 = vpop.f32.mrb[0].mxu0
    %v3555 = vpop.f32.mrb[0].mxu0
    %3556 = vdwg.mxu0
    %3557 = vmatprep.subr.bf16.mxu0 %v2369
    %3558 = vmatpush1.bf16.msra.mxu0 %v2368
    %3559 = vmatprep.subr.bf16.mxu0 %v2377
    %3560 = vmatpush1.bf16.msra.mxu0 %v2376
    %3561 = vmatprep.subr.bf16.mxu0 %v2385
    %3562 = vmatpush1.bf16.msra.mxu0 %v2384
    %3563 = vmatprep.subr.bf16.mxu0 %v2393
    %3564 = vmatpush1.bf16.msra.mxu0 %v2392
    %3565 = vmatprep.subr.bf16.mxu0 %v2401
    %3566 = vmatpush1.bf16.msra.mxu0 %v2400
    %3567 = vmatprep.subr.bf16.mxu0 %v2409
    %3568 = vmatpush1.bf16.msra.mxu0 %v2408
    %3569 = vmatprep.subr.bf16.mxu0 %v2417
    %3570 = vmatpush1.bf16.msra.mxu0 %v2416
    %3571 = vmatprep.subr.bf16.mxu0 %v2425
    %3572 = vmatpush1.bf16.msra.mxu0 %v2424
    %3573 = vmatprep.subr.bf16.mxu0 %v2433
    %3574 = vmatpush1.bf16.msra.mxu0 %v2432
    %3575 = vmatprep.subr.bf16.mxu0 %v2441
    %3576 = vmatpush1.bf16.msra.mxu0 %v2440
    %3577 = vmatprep.subr.bf16.mxu0 %v2449
    %3578 = vmatpush1.bf16.msra.mxu0 %v2448
    %3579 = vmatprep.subr.bf16.mxu0 %v2457
    %3580 = vmatpush1.bf16.msra.mxu0 %v2456
    %3581 = vmatprep.subr.bf16.mxu0 0
    %3582 = vmatpush1.bf16.msra.mxu0 0
    %3583 = vmatprep.subr.bf16.mxu0 0
    %3584 = vmatpush1.bf16.msra.mxu0 0
    %3585 = vmatprep.subr.bf16.mxu0 0
    %3586 = vmatpush1.bf16.msra.mxu0 0
    %3587 = vmatprep.subr.bf16.mxu0 0
    %3588 = vmatpush1.bf16.msra.mxu0 0
    %3589 = vmatprep.mubr.bf16.mxu0 %v2940
    %3590 = vmatmul.mubr.bf16.gmra.mrb[0].mxu0 %v56
    %v3591 = vpop.f32.mrb[0].mxu0
    %v3592 = vadd.f32 %v3551, %v3591
    %v3593 = vpop.f32.mrb[0].mxu0
    %v3594 = vadd.f32 %v3553, %v3593
    %v3595 = vpop.f32.mrb[0].mxu0
    %v3596 = vpop.f32.mrb[0].mxu0
    %3597 = vdwg.mxu0
    %3598 = vst [vmem:[#allocation7] sm:$0xff] %v3100
    %3599 = vst [vmem:[#allocation7 + $0x8] sm:$0xff] %v3102
    %3600 = vst [vmem:[#allocation7 + $0x10] sm:$0xff] %v3264
    %3601 = vst [vmem:[#allocation7 + $0x18] sm:$0xff] %v3266
    %3602 = vst [vmem:[#allocation7 + $0x20] sm:$0xff] %v3428
    %3603 = vst [vmem:[#allocation7 + $0x28] sm:$0xff] %v3430
    %3604 = vst [vmem:[#allocation7 + $0x30] sm:$0xff] %v3592
    %3605 = vst.msk [vmem:[#allocation7 + $0x38] sm:$0xff] %vm2938, %v3594
    %v3606 = vrot.slane %v3100, 4
    %v3607 = vadd.f32 %v3100, %v3606
    %v3608 = vrot.slane %v3607, 2
    %v3609 = vadd.f32 %v3607, %v3608
    %v3610 = vrot.slane %v3609, 1
    %v3611 = vadd.f32 %v3609, %v3610
    %v3612 = vrot.slane %v3102, 4
    %v3613 = vadd.f32 %v3102, %v3612
    %v3614 = vrot.slane %v3613, 2
    %v3615 = vadd.f32 %v3613, %v3614
    %v3616 = vrot.slane %v3615, 1
    %v3617 = vadd.f32 %v3615, %v3616
    %v3618 = vrot.slane %v3264, 4
    %v3619 = vadd.f32 %v3264, %v3618
    %v3620 = vrot.slane %v3619, 2
    %v3621 = vadd.f32 %v3619, %v3620
    %v3622 = vrot.slane %v3621, 1
    %v3623 = vadd.f32 %v3621, %v3622
    %v3624 = vrot.slane %v3266, 4
    %v3625 = vadd.f32 %v3266, %v3624
    %v3626 = vrot.slane %v3625, 2
    %v3627 = vadd.f32 %v3625, %v3626
    %v3628 = vrot.slane %v3627, 1
    %v3629 = vadd.f32 %v3627, %v3628
    %v3630 = vrot.slane %v3428, 4
    %v3631 = vadd.f32 %v3428, %v3630
    %v3632 = vrot.slane %v3631, 2
    %v3633 = vadd.f32 %v3631, %v3632
    %v3634 = vrot.slane %v3633, 1
    %v3635 = vadd.f32 %v3633, %v3634
    %v3636 = vrot.slane %v3430, 4
    %v3637 = vadd.f32 %v3430, %v3636
    %v3638 = vrot.slane %v3637, 2
    %v3639 = vadd.f32 %v3637, %v3638
    %v3640 = vrot.slane %v3639, 1
    %v3641 = vadd.f32 %v3639, %v3640
    %v3642 = vrot.slane %v3592, 4
    %v3643 = vadd.f32 %v3592, %v3642
    %v3644 = vrot.slane %v3643, 2
    %v3645 = vadd.f32 %v3643, %v3644
    %v3646 = vrot.slane %v3645, 1
    %v3647 = vadd.f32 %v3645, %v3646
    %v3648 = vsel %vm2938, %v3594, 0.0
    %v3649 = vrot.slane %v3648, 4
    %v3650 = vadd.f32 %v3648, %v3649
    %v3651 = vrot.slane %v3650, 2
    %v3652 = vadd.f32 %v3650, %v3651
    %v3653 = vrot.slane %v3652, 1
    %v3654 = vadd.f32 %v3652, %v3653
    %v3663 = vcombine.low %v3611, %v3617
    %v3664 = vcombine.low %v3623, %v3629
    %v3665 = vcombine.low %v3635, %v3641
    %v3666 = vcombine.low %v3647, %v3654
    %v3668 = vunpack.c.l.s4 1966171168
    %v3669 = vunpack.c.0.s8 %v3668
    %v3670 = vlaneseq
    %v3671 = vshrl.u32 %v3670, 7
    %v3672 = vsub.s32 %v3669, %v3671
    %v3673 = vrot.slane %v3663, %v3672
    %v3675 = vunpack.c.l.s4 1966171168
    %v3676 = vunpack.c.0.s8 %v3675
    %v3677 = vlaneseq
    %v3678 = vshrl.u32 %v3677, 7
    %v3679 = vsub.s32 %v3676, %v3678
    %v3680 = vrot.slane %v3664, %v3679
    %v3682 = vunpack.c.l.s4 1966171168
    %v3683 = vunpack.c.0.s8 %v3682
    %v3684 = vlaneseq
    %v3685 = vshrl.u32 %v3684, 7
    %v3686 = vsub.s32 %v3683, %v3685
    %v3687 = vrot.slane %v3665, %v3686
    %v3689 = vunpack.c.l.s4 1966171168
    %v3690 = vunpack.c.0.s8 %v3689
    %v3691 = vlaneseq
    %v3692 = vshrl.u32 %v3691, 7
    %v3693 = vsub.s32 %v3690, %v3692
    %v3694 = vrot.slane %v3666, %v3693
    %v3695 = vcombine.low %v3673, %v3680
    %v3696 = vcombine.low %v3687, %v3694
    %v3698 = vunpack.c.l.s4 1966171168
    %v3699 = vunpack.c.0.s8 %v3698
    %v3700 = vlaneseq
    %v3701 = vshrl.u32 %v3700, 7
    %v3702 = vsub.s32 %v3699, %v3701
    %v3703 = vrot.slane %v3695, %v3702
    %v3705 = vunpack.c.l.s4 1966171168
    %v3706 = vunpack.c.0.s8 %v3705
    %v3707 = vlaneseq
    %v3708 = vshrl.u32 %v3707, 7
    %v3709 = vsub.s32 %v3706, %v3708
    %v3710 = vrot.slane %v3696, %v3709
    %v3711 = vcombine.low %v3703, %v3710
    %v3713 = vlaneseq
    %vm3714 = vcmp.ge.s32.totalorder %v3713, 0
    %vm3715 = vcmp.lt.s32.totalorder %v3713, 960
    %vm3716 = vmand %vm3714, %vm3715
    %3717 = vst.msk [vmem:[#allocation8] ss:$2 sm:$0xff] %vm3716, %v3711
    %v3718 = vmul.f32 %v3100, %v3100
    %v3719 = vmul.f32 %v3102, %v3102
    %v3720 = vmul.f32 %v3264, %v3264
    %v3721 = vmul.f32 %v3266, %v3266
    %v3722 = vmul.f32 %v3428, %v3428
    %v3723 = vmul.f32 %v3430, %v3430
    %v3724 = vmul.f32 %v3592, %v3592
    %v3725 = vmul.f32 %v3594, %v3594
    %v3726 = vrot.slane %v3718, 4
    %v3727 = vadd.f32 %v3718, %v3726
    %v3728 = vrot.slane %v3727, 2
    %v3729 = vadd.f32 %v3727, %v3728
    %v3730 = vrot.slane %v3729, 1
    %v3731 = vadd.f32 %v3729, %v3730
    %v3732 = vrot.slane %v3719, 4
    %v3733 = vadd.f32 %v3719, %v3732
    %v3734 = vrot.slane %v3733, 2
    %v3735 = vadd.f32 %v3733, %v3734
    %v3736 = vrot.slane %v3735, 1
    %v3737 = vadd.f32 %v3735, %v3736
    %v3738 = vrot.slane %v3720, 4
    %v3739 = vadd.f32 %v3720, %v3738
    %v3740 = vrot.slane %v3739, 2
    %v3741 = vadd.f32 %v3739, %v3740
    %v3742 = vrot.slane %v3741, 1
    %v3743 = vadd.f32 %v3741, %v3742
    %v3744 = vrot.slane %v3721, 4
    %v3745 = vadd.f32 %v3721, %v3744
    %v3746 = vrot.slane %v3745, 2
    %v3747 = vadd.f32 %v3745, %v3746
    %v3748 = vrot.slane %v3747, 1
    %v3749 = vadd.f32 %v3747, %v3748
    %v3750 = vrot.slane %v3722, 4
    %v3751 = vadd.f32 %v3722, %v3750
    %v3752 = vrot.slane %v3751, 2
    %v3753 = vadd.f32 %v3751, %v3752
    %v3754 = vrot.slane %v3753, 1
    %v3755 = vadd.f32 %v3753, %v3754
    %v3756 = vrot.slane %v3723, 4
    %v3757 = vadd.f32 %v3723, %v3756
    %v3758 = vrot.slane %v3757, 2
    %v3759 = vadd.f32 %v3757, %v3758
    %v3760 = vrot.slane %v3759, 1
    %v3761 = vadd.f32 %v3759, %v3760
    %v3762 = vrot.slane %v3724, 4
    %v3763 = vadd.f32 %v3724, %v3762
    %v3764 = vrot.slane %v3763, 2
    %v3765 = vadd.f32 %v3763, %v3764
    %v3766 = vrot.slane %v3765, 1
    %v3767 = vadd.f32 %v3765, %v3766
    %v3768 = vsel %vm2938, %v3725, 0.0
    %v3769 = vrot.slane %v3768, 4
    %v3770 = vadd.f32 %v3768, %v3769
    %v3771 = vrot.slane %v3770, 2
    %v3772 = vadd.f32 %v3770, %v3771
    %v3773 = vrot.slane %v3772, 1
    %v3774 = vadd.f32 %v3772, %v3773
    %v3783 = vcombine.low %v3731, %v3737
    %v3784 = vcombine.low %v3743, %v3749
    %v3785 = vcombine.low %v3755, %v3761
    %v3786 = vcombine.low %v3767, %v3774
    %v3788 = vunpack.c.l.s4 1966171168
    %v3789 = vunpack.c.0.s8 %v3788
    %v3790 = vlaneseq
    %v3791 = vshrl.u32 %v3790, 7
    %v3792 = vsub.s32 %v3789, %v3791
    %v3793 = vrot.slane %v3783, %v3792
    %v3795 = vunpack.c.l.s4 1966171168
    %v3796 = vunpack.c.0.s8 %v3795
    %v3797 = vlaneseq
    %v3798 = vshrl.u32 %v3797, 7
    %v3799 = vsub.s32 %v3796, %v3798
    %v3800 = vrot.slane %v3784, %v3799
    %v3802 = vunpack.c.l.s4 1966171168
    %v3803 = vunpack.c.0.s8 %v3802
    %v3804 = vlaneseq
    %v3805 = vshrl.u32 %v3804, 7
    %v3806 = vsub.s32 %v3803, %v3805
    %v3807 = vrot.slane %v3785, %v3806
    %v3809 = vunpack.c.l.s4 1966171168
    %v3810 = vunpack.c.0.s8 %v3809
    %v3811 = vlaneseq
    %v3812 = vshrl.u32 %v3811, 7
    %v3813 = vsub.s32 %v3810, %v3812
    %v3814 = vrot.slane %v3786, %v3813
    %v3815 = vcombine.low %v3793, %v3800
    %v3816 = vcombine.low %v3807, %v3814
    %v3818 = vunpack.c.l.s4 1966171168
    %v3819 = vunpack.c.0.s8 %v3818
    %v3820 = vlaneseq
    %v3821 = vshrl.u32 %v3820, 7
    %v3822 = vsub.s32 %v3819, %v3821
    %v3823 = vrot.slane %v3815, %v3822
    %v3825 = vunpack.c.l.s4 1966171168
    %v3826 = vunpack.c.0.s8 %v3825
    %v3827 = vlaneseq
    %v3828 = vshrl.u32 %v3827, 7
    %v3829 = vsub.s32 %v3826, %v3828
    %v3830 = vrot.slane %v3816, %v3829
    %v3831 = vcombine.low %v3823, %v3830
    %s3833 = scalar_lea.vmem [#allocation8], 1
    %3834 = vst.msk [vmem:[%s3833] ss:$2 sm:$0xff] %vm3716, %v3831
    // Predicated region
    $region18: #{tpu_custom_call.1} parent=1 // pred_check
      _
    $region19: #{tpu_custom_call.1} parent=1 // pred_check_branch
      %3836 = sbr.rel (0) target = $region21
    $region20: #{tpu_custom_call.1} parent=1 // pred_region
      %s3838 = ssub.s32 1024, 1024
      %3839 = vsyncadd [#allocation4], %s3838
      %s3841 = sshll.u32 [#allocation7], 4
      %s3842 = int_to_ptr.vmem [resolvable:$true] %s3841
      %3844 = dma.vmem_to_hbm [thread:$0]  %s3842, 1024, %s2, [#allocation4]
    $region21: #{tpu_custom_call.1} parent=1 // pred_fallthru
      _
    // Predicated region
    $region22: #{tpu_custom_call.1} parent=1 // pred_check
      _
    $region23: #{tpu_custom_call.1} parent=1 // pred_check_branch
      %3846 = sbr.rel (0) target = $region25
    $region24: #{tpu_custom_call.1} parent=1 // pred_region
      %s3848 = ssub.s32 256, 256
      %3849 = vsyncadd [#allocation9], %s3848
      %s3851 = sshll.u32 [#allocation8], 4
      %s3852 = int_to_ptr.vmem [resolvable:$true] %s3851
      %3854 = dma.vmem_to_hbm [thread:$0]  %s3852, 256, %s3, [#allocation9]
    $region25: #{tpu_custom_call.1} parent=1 // pred_fallthru
      _
    // Predicated region
    $region26: #{tpu_custom_call.1} parent=1 // pred_check
      _
    $region27: #{tpu_custom_call.1} parent=1 // pred_check_branch
      %3856 = sbr.rel (0) target = $region29
    $region28: #{tpu_custom_call.1} parent=1 // pred_region
      %3857 = dma.done [#allocation4], 1024
    $region29: #{tpu_custom_call.1} parent=1 // pred_fallthru
      _
    // Predicated region
    $region30: #{tpu_custom_call.1} parent=1 // pred_check
      _
    $region31: #{tpu_custom_call.1} parent=1 // pred_check_branch
      %3859 = sbr.rel (0) target = $region33
    $region32: #{tpu_custom_call.1} parent=1 // pred_region
      %3860 = dma.done [#allocation9], 256
    $region33: #{tpu_custom_call.1} parent=1 // pred_fallthru
      _
    %3861 = vsyncpa [#allocation3], 1
    %3862 = vsyncpa [#allocation6], 1
    %3863 = vsyncpa [#allocation4], 1
    %3864 = vsyncpa [#allocation9], 1

</llo_original>
